<compile_context>
chip_gen: v7x
topology: tpu7x:2x2x1
jax: 0.10.0
libtpu: 0.0.40
codegen_flags: <defaults>
</compile_context>

<pallas_src>
import jax
import jax.numpy as jnp
from jax import lax
from jax.experimental import pallas as pl
from jax.experimental.pallas import tpu as pltpu

K = 7            # conv kernel size (odd, as required by the module)
PAD = K // 2     # spatial padding = 3


def spatial_attention_kernel(w_ref, x_ref, o_ref, sum_ref, max_ref, pad_ref):
    # w_ref  : SMEM, (2*K*K,) f32 conv weights, layout [cin, kh, kw]; the
    #          avg-channel weights are pre-scaled by 1/C in the wrapper.
    # x_ref  : VMEM, (b_blk, c_blk, H, W) input block for this grid step.
    # o_ref  : VMEM, (b_blk, H, W) output block (resident across the C axis).
    # sum_ref/max_ref : VMEM (b_blk, H, W) f32 running channel sum / max.
    # pad_ref: VMEM, (2, H+2*PAD, W+2*PAD) f32 zero-bordered conv input planes.
    b_blk, c_blk, H, W = x_ref.shape
    c_step = pl.program_id(1)
    last_c = pl.num_programs(1) - 1

    # ---- init running accumulators at the first channel step ---------------
    @pl.when(c_step == 0)
    def _init():
        sum_ref[...] = jnp.zeros(sum_ref.shape, sum_ref.dtype)
        max_ref[...] = jnp.full(max_ref.shape, -jnp.inf, dtype=max_ref.dtype)

    # ---- accumulate this channel tile (streaming reduction) ----------------
    def _accum(b, carry):
        blk = x_ref[b].astype(jnp.float32)                    # (c_blk, H, W)
        sum_ref[b] = sum_ref[b] + jnp.sum(blk, axis=0)
        max_ref[b] = jnp.maximum(max_ref[b], jnp.max(blk, axis=0))
        return carry

    lax.fori_loop(0, b_blk, _accum, 0)

    # ---- finalize: 7x7 conv over [mean, max] planes + sigmoid ---------------
    @pl.when(c_step == last_c)
    def _finalize():
        Hp = H + 2 * PAD
        Wp = W + 2 * PAD

        # Hoist the 2*K*K SMEM weight scalars once; reused for every image.
        w = [w_ref[i] for i in range(2 * K * K)]

        # Clear only the PAD-wide zero border (interior is overwritten for
        # every image below).  Re-cleared every finalize step, not just
        # program_id == 0, so megacore-sharded batch blocks stay correct.
        for c in range(2):
            pad_ref[c, :PAD, :] = jnp.zeros((PAD, Wp), jnp.float32)
            pad_ref[c, PAD + H:, :] = jnp.zeros((PAD, Wp), jnp.float32)
            pad_ref[c, PAD:PAD + H, :PAD] = jnp.zeros((H, PAD), jnp.float32)
            pad_ref[c, PAD:PAD + H, PAD + W:] = jnp.zeros((H, PAD), jnp.float32)

        def _conv_one(b, carry):
            # Interiors of the zero-padded [sum, max] planes (the 1/C of the
            # mean is folded into the avg-channel weights).
            pad_ref[0, PAD:PAD + H, PAD:PAD + W] = sum_ref[b]
            pad_ref[1, PAD:PAD + H, PAD:PAD + W] = max_ref[b]

            # Lane-shift hoisting:
            #   cols[kx][r, j] == padded[c, r, j + kx]        (7 lane slices)
            #   plane_{c,ky}   == sum_kx w[c,ky,kx]*cols[kx]  (full-plane FMAs)
            #   acc[i, j]     += plane_{c,ky}[i + ky, j]      (sublane slices)
            acc = jnp.zeros((H, W), jnp.float32)
            for c in range(2):
                cols = [pad_ref[c, :, kx:kx + W] for kx in range(K)]
                for ky in range(K):
                    base = c * K * K + ky * K
                    plane = cols[0] * w[base]
                    for kx in range(1, K):
                        plane = plane + cols[kx] * w[base + kx]
                    acc = acc + plane[ky:ky + H, :]

            # For production W (multiple of 128) this store is lane-dense; for
            # the 16-wide demo a lane-dense relayout would cost more than the
            # masked vst it saves.
            o_ref[b] = jax.nn.sigmoid(acc).astype(o_ref.dtype)
            return carry

        lax.fori_loop(0, b_blk, _conv_one, 0)


def _tpu_vmem_capacity_bytes():
    try:
        return int(pltpu.get_tpu_info().vmem_capacity_bytes)
    except Exception:
        return 64 << 20          # conservative: v7x per-TensorCore VMEM


def _footprint_bytes(b_blk, c_blk, H, W, itemsize):
    in_blk = b_blk * c_blk * H * W * itemsize      # pipelined input block
    out_blk = b_blk * H * W * itemsize             # pipelined output block
    acc = 2 * b_blk * H * W * 4                    # sum + max f32 scratch
    pad = 2 * (H + 2 * PAD) * (W + 2 * PAD) * 4    # padded conv planes
    return 2 * in_blk + 2 * out_blk + acc + pad    # blocks double-buffered


def _pick_blocks(N, C, H, W, itemsize, budget_bytes):
    """Choose (b_blk, c_blk): fit the double-buffered footprint in the
    per-generation VMEM budget while keeping >= 4 (else >= 2) channel grid
    steps for pipeline overlap, and >= 2 batch steps so the 'parallel' axis
    can be sharded across TensorCores."""
    def fits(b, c):
        return _footprint_bytes(b, c, H, W, itemsize) <= budget_bytes

    if not fits(1, 1):
        # TODO(synk): tile H with a PAD-row halo for planes too large for a
        # single (H, W) block; not needed for RCAN-scale feature maps.
        raise ValueError("single (H, W) plane exceeds the VMEM budget")

    c_divs = [d for d in range(1, C + 1) if C % d == 0]
    c_blk = 1
    for min_steps in (4, 2, 1):
        cands = [d for d in c_divs if fits(1, d) and C // d >= min_steps]
        if cands:
            c_blk = max(cands)
            break

    b_blk = 1
    for d in range(1, max(1, N // 2) + 1):
        if N % d == 0 and fits(d, c_blk):
            b_blk = d
    return b_blk, c_blk


def spatial_attention(x, w):
    """x: (N, C, H, W); w: (1, 2, K, K) conv weight (OIHW). Returns (N, 1, H, W)."""
    N, C, H, W = x.shape
    assert w.shape == (1, 2, K, K), w.shape

    # Fold the 1/C of the channel mean into the avg-channel weights so the
    # kernel only keeps a running sum.  (Note: sum-then-scale vs mean-then-conv
    # changes f32 accumulation order slightly; fine at 1e-5 tolerance.)
    w_eff = jnp.asarray(w, jnp.float32)
    w_eff = w_eff.at[:, 0].multiply(1.0 / C)
    w_flat = w_eff.reshape(-1)                      # [cin, kh, kw] SMEM table

    itemsize = x.dtype.itemsize
    cap = _tpu_vmem_capacity_bytes()
    budget = min(cap // 3, 32 << 20)   # ~21 MiB on v7x (64 MiB VMEM), 32 MiB on v5e/v6e
    b_blk, c_blk = _pick_blocks(N, C, H, W, itemsize, budget)

    # Explicit scoped-VMEM limit with headroom so production shapes neither
    # trip the 16 MiB (v5e) / 32 MiB (v6e, v7x) defaults nor lose buffering.
    needed = _footprint_bytes(b_blk, c_blk, H, W, itemsize)
    vmem_limit = int(min(cap * 3 // 4, max(2 * needed, 16 << 20)))

    out = pl.pallas_call(
        spatial_attention_kernel,
        out_shape=jax.ShapeDtypeStruct((N, H, W), x.dtype),
        grid=(N // b_blk, C // c_blk),
        in_specs=[
            pl.BlockSpec(memory_space=pltpu.SMEM),                       # weights
            pl.BlockSpec((b_blk, c_blk, H, W), lambda n, c: (n, c, 0, 0)),
        ],
        out_specs=pl.BlockSpec((b_blk, H, W), lambda n, c: (n, 0, 0)),
        scratch_shapes=[
            pltpu.VMEM((b_blk, H, W), jnp.float32),                 # running sum
            pltpu.VMEM((b_blk, H, W), jnp.float32),                 # running max
            pltpu.VMEM((2, H + 2 * PAD, W + 2 * PAD), jnp.float32), # padded planes
        ],
        compiler_params=pltpu.CompilerParams(
            dimension_semantics=("parallel", "arbitrary"),  # batch || , C reduce
            vmem_limit_bytes=vmem_limit,
        ),
    )(w_flat, x)
    return out.reshape(N, 1, H, W)


def ref_forward(x, w):
    """Pure-JAX reference matching the PyTorch module."""
    avg = jnp.mean(x, axis=1, keepdims=True)
    mx = jnp.max(x, axis=1, keepdims=True)
    xc = jnp.concatenate([avg, mx], axis=1)
    out = lax.conv_general_dilated(
        xc, w, window_strides=(1, 1),
        padding=((PAD, PAD), (PAD, PAD)),
        dimension_numbers=("NCHW", "OIHW", "NCHW"),
    )
    return jax.nn.sigmoid(out)


if __name__ == "__main__":
    key = jax.random.PRNGKey(0)
    kx_key, kw_key = jax.random.split(key)

    N, C, H, W = 2, 4, 16, 16
    x = jax.random.normal(kx_key, (N, C, H, W), dtype=jnp.float32)
    # nn.Conv2d(2, 1, 7, bias=False) -> weight shape (1, 2, 7, 7).
    w = jax.random.normal(kw_key, (1, 2, K, K), dtype=jnp.float32) * 0.1

    out = spatial_attention(x, w)
    out = jax.block_until_ready(out)

    expected = ref_forward(x, w)
    assert out.shape == (N, 1, H, W), out.shape
    assert jnp.allclose(out, expected, atol=1e-5, rtol=1e-5), (
        float(jnp.max(jnp.abs(out - expected)))
    )
    print("KERNEL_OK")
</pallas_src>

<mosaic_0001>
module attributes {stable_mosaic.version = 11 : i64} {
  func.func @spatial_attention_kernel(%arg0: i32, %arg1: i32, %arg2: memref<98xf32, #tpu.memory_space<smem>>, %arg3: memref<1x1x16x16xf32, #tpu.memory_space<vmem>>, %arg4: memref<1x16x16xf32, #tpu.memory_space<vmem>>, %arg5: memref<1x16x16xf32, #tpu.memory_space<vmem>>, %arg6: memref<1x16x16xf32, #tpu.memory_space<vmem>>, %arg7: memref<2x22x22xf32, #tpu.memory_space<vmem>>) attributes {dimension_semantics = [#tpu.dimension_semantics<parallel>, #tpu.dimension_semantics<arbitrary>], iteration_bounds = array<i64: 2, 4>, scalar_prefetch = 0 : i64, scratch_operands = 3 : i64, tpu.core_type = #tpu.core_type<tc>, window_params = [{transform_indices = @transform_0, window_bounds = array<i64: 98>}, {transform_indices = @transform_1, window_bounds = array<i64: 1, 1, 16, 16>}, {transform_indices = @transform_2, window_bounds = array<i64: 1, 16, 16>}]} {
    %c0_i32 = arith.constant 0 : i32
    %0 = arith.cmpi eq, %arg1, %c0_i32 : i32
    %1 = arith.extui %0 : i1 to i32
    %c0_i32_0 = arith.constant 0 : i32
    %2 = arith.cmpi ne, %1, %c0_i32_0 : i32
    scf.if %2 {
      %cst_14 = arith.constant 0.000000e+00 : f32
      %27 = vector.broadcast %cst_14 : f32 to vector<1x16x16xf32>
      %c0_15 = arith.constant 0 : index
      %c0_16 = arith.constant 0 : index
      %c0_17 = arith.constant 0 : index
      %28 = vector.load %arg5[%c0_15, %c0_16, %c0_17] : memref<1x16x16xf32, #tpu.memory_space<vmem>>, vector<1x16x16xf32>
      tpu.vector_store %arg5[%c0_15, %c0_16, %c0_17], %27 {strides = array<i32>} : memref<1x16x16xf32, #tpu.memory_space<vmem>>, vector<1x16x16xf32>,
      %cst_18 = arith.constant 0xFF800000 : f32
      %29 = vector.broadcast %cst_18 : f32 to vector<1x16x16xf32>
      %c0_19 = arith.constant 0 : index
      %c0_20 = arith.constant 0 : index
      %c0_21 = arith.constant 0 : index
      %30 = vector.load %arg6[%c0_19, %c0_20, %c0_21] : memref<1x16x16xf32, #tpu.memory_space<vmem>>, vector<1x16x16xf32>
      tpu.vector_store %arg6[%c0_19, %c0_20, %c0_21], %29 {strides = array<i32>} : memref<1x16x16xf32, #tpu.memory_space<vmem>>, vector<1x16x16xf32>,
    } else {
    }
    %c0_i32_1 = arith.constant 0 : i32
    %3 = arith.index_cast %c0_i32_1 : i32 to index
    %c0 = arith.constant 0 : index
    %c0_2 = arith.constant 0 : index
    %c0_3 = arith.constant 0 : index
    %4 = vector.load %arg3[%3, %c0, %c0_2, %c0_3] : memref<1x1x16x16xf32, #tpu.memory_space<vmem>>, vector<1x1x16x16xf32>
    %5 = vector.shape_cast %4 : vector<1x1x16x16xf32> to vector<1x16x16xf32>
    %6 = arith.index_cast %c0_i32_1 : i32 to index
    %c0_4 = arith.constant 0 : index
    %c0_5 = arith.constant 0 : index
    %7 = vector.load %arg5[%6, %c0_4, %c0_5] : memref<1x16x16xf32, #tpu.memory_space<vmem>>, vector<1x16x16xf32>
    %8 = vector.shape_cast %7 : vector<1x16x16xf32> to vector<16x16xf32>
    %cst = arith.constant dense<0.000000e+00> : vector<16x16xf32>
    %9 = vector.multi_reduction <add>, %5, %cst [0] : vector<1x16x16xf32> to vector<16x16xf32>
    %10 = arith.addf %8, %9 : vector<16x16xf32>
    %11 = arith.index_cast %c0_i32_1 : i32 to index
    %c0_6 = arith.constant 0 : index
    %c0_7 = arith.constant 0 : index
    %12 = vector.load %arg5[%11, %c0_6, %c0_7] : memref<1x16x16xf32, #tpu.memory_space<vmem>>, vector<1x16x16xf32>
    %13 = vector.shape_cast %12 : vector<1x16x16xf32> to vector<16x16xf32>
    %14 = vector.shape_cast %10 : vector<16x16xf32> to vector<1x16x16xf32>
    tpu.vector_store %arg5[%11, %c0_6, %c0_7], %14 {strides = array<i32>} : memref<1x16x16xf32, #tpu.memory_space<vmem>>, vector<1x16x16xf32>,
    %15 = arith.index_cast %c0_i32_1 : i32 to index
    %c0_8 = arith.constant 0 : index
    %c0_9 = arith.constant 0 : index
    %16 = vector.load %arg6[%15, %c0_8, %c0_9] : memref<1x16x16xf32, #tpu.memory_space<vmem>>, vector<1x16x16xf32>
    %17 = vector.shape_cast %16 : vector<1x16x16xf32> to vector<16x16xf32>
    %cst_10 = arith.constant dense<0xFF800000> : vector<16x16xf32>
    %18 = vector.multi_reduction <maximumf>, %5, %cst_10 [0] : vector<1x16x16xf32> to vector<16x16xf32>
    %19 = arith.maximumf %17, %18 : vector<16x16xf32>
    %20 = arith.index_cast %c0_i32_1 : i32 to index
    %c0_11 = arith.constant 0 : index
    %c0_12 = arith.constant 0 : index
    %21 = vector.load %arg6[%20, %c0_11, %c0_12] : memref<1x16x16xf32, #tpu.memory_space<vmem>>, vector<1x16x16xf32>
    %22 = vector.shape_cast %21 : vector<1x16x16xf32> to vector<16x16xf32>
    %23 = vector.shape_cast %19 : vector<16x16xf32> to vector<1x16x16xf32>
    tpu.vector_store %arg6[%20, %c0_11, %c0_12], %23 {strides = array<i32>} : memref<1x16x16xf32, #tpu.memory_space<vmem>>, vector<1x16x16xf32>,
    %c1_i32 = arith.constant 1 : i32
    %c3_i32 = arith.constant 3 : i32
    %24 = arith.cmpi eq, %arg1, %c3_i32 : i32
    %25 = arith.extui %24 : i1 to i32
    %c0_i32_13 = arith.constant 0 : i32
    %26 = arith.cmpi ne, %25, %c0_i32_13 : i32
    scf.if %26 {
      %c0_14 = arith.constant 0 : index
      %27 = memref.load %arg2[%c0_14] : memref<98xf32, #tpu.memory_space<smem>>
      %c1 = arith.constant 1 : index
      %28 = memref.load %arg2[%c1] : memref<98xf32, #tpu.memory_space<smem>>
      %c2 = arith.constant 2 : index
      %29 = memref.load %arg2[%c2] : memref<98xf32, #tpu.memory_space<smem>>
      %c3 = arith.constant 3 : index
      %30 = memref.load %arg2[%c3] : memref<98xf32, #tpu.memory_space<smem>>
      %c4 = arith.constant 4 : index
      %31 = memref.load %arg2[%c4] : memref<98xf32, #tpu.memory_space<smem>>
      %c5 = arith.constant 5 : index
      %32 = memref.load %arg2[%c5] : memref<98xf32, #tpu.memory_space<smem>>
      %c6 = arith.constant 6 : index
      %33 = memref.load %arg2[%c6] : memref<98xf32, #tpu.memory_space<smem>>
      %c7 = arith.constant 7 : index
      %34 = memref.load %arg2[%c7] : memref<98xf32, #tpu.memory_space<smem>>
      %c8 = arith.constant 8 : index
      %35 = memref.load %arg2[%c8] : memref<98xf32, #tpu.memory_space<smem>>
      %c9 = arith.constant 9 : index
      %36 = memref.load %arg2[%c9] : memref<98xf32, #tpu.memory_space<smem>>
      %c10 = arith.constant 10 : index
      %37 = memref.load %arg2[%c10] : memref<98xf32, #tpu.memory_space<smem>>
      %c11 = arith.constant 11 : index
      %38 = memref.load %arg2[%c11] : memref<98xf32, #tpu.memory_space<smem>>
      %c12 = arith.constant 12 : index
      %39 = memref.load %arg2[%c12] : memref<98xf32, #tpu.memory_space<smem>>
      %c13 = arith.constant 13 : index
      %40 = memref.load %arg2[%c13] : memref<98xf32, #tpu.memory_space<smem>>
      %c14 = arith.constant 14 : index
      %41 = memref.load %arg2[%c14] : memref<98xf32, #tpu.memory_space<smem>>
      %c15 = arith.constant 15 : index
      %42 = memref.load %arg2[%c15] : memref<98xf32, #tpu.memory_space<smem>>
      %c16 = arith.constant 16 : index
      %43 = memref.load %arg2[%c16] : memref<98xf32, #tpu.memory_space<smem>>
      %c17 = arith.constant 17 : index
      %44 = memref.load %arg2[%c17] : memref<98xf32, #tpu.memory_space<smem>>
      %c18 = arith.constant 18 : index
      %45 = memref.load %arg2[%c18] : memref<98xf32, #tpu.memory_space<smem>>
      %c19 = arith.constant 19 : index
      %46 = memref.load %arg2[%c19] : memref<98xf32, #tpu.memory_space<smem>>
      %c20 = arith.constant 20 : index
      %47 = memref.load %arg2[%c20] : memref<98xf32, #tpu.memory_space<smem>>
      %c21 = arith.constant 21 : index
      %48 = memref.load %arg2[%c21] : memref<98xf32, #tpu.memory_space<smem>>
      %c22 = arith.constant 22 : index
      %49 = memref.load %arg2[%c22] : memref<98xf32, #tpu.memory_space<smem>>
      %c23 = arith.constant 23 : index
      %50 = memref.load %arg2[%c23] : memref<98xf32, #tpu.memory_space<smem>>
      %c24 = arith.constant 24 : index
      %51 = memref.load %arg2[%c24] : memref<98xf32, #tpu.memory_space<smem>>
      %c25 = arith.constant 25 : index
      %52 = memref.load %arg2[%c25] : memref<98xf32, #tpu.memory_space<smem>>
      %c26 = arith.constant 26 : index
      %53 = memref.load %arg2[%c26] : memref<98xf32, #tpu.memory_space<smem>>
      %c27 = arith.constant 27 : index
      %54 = memref.load %arg2[%c27] : memref<98xf32, #tpu.memory_space<smem>>
      %c28 = arith.constant 28 : index
      %55 = memref.load %arg2[%c28] : memref<98xf32, #tpu.memory_space<smem>>
      %c29 = arith.constant 29 : index
      %56 = memref.load %arg2[%c29] : memref<98xf32, #tpu.memory_space<smem>>
      %c30 = arith.constant 30 : index
      %57 = memref.load %arg2[%c30] : memref<98xf32, #tpu.memory_space<smem>>
      %c31 = arith.constant 31 : index
      %58 = memref.load %arg2[%c31] : memref<98xf32, #tpu.memory_space<smem>>
      %c32 = arith.constant 32 : index
      %59 = memref.load %arg2[%c32] : memref<98xf32, #tpu.memory_space<smem>>
      %c33 = arith.constant 33 : index
      %60 = memref.load %arg2[%c33] : memref<98xf32, #tpu.memory_space<smem>>
      %c34 = arith.constant 34 : index
      %61 = memref.load %arg2[%c34] : memref<98xf32, #tpu.memory_space<smem>>
      %c35 = arith.constant 35 : index
      %62 = memref.load %arg2[%c35] : memref<98xf32, #tpu.memory_space<smem>>
      %c36 = arith.constant 36 : index
      %63 = memref.load %arg2[%c36] : memref<98xf32, #tpu.memory_space<smem>>
      %c37 = arith.constant 37 : index
      %64 = memref.load %arg2[%c37] : memref<98xf32, #tpu.memory_space<smem>>
      %c38 = arith.constant 38 : index
      %65 = memref.load %arg2[%c38] : memref<98xf32, #tpu.memory_space<smem>>
      %c39 = arith.constant 39 : index
      %66 = memref.load %arg2[%c39] : memref<98xf32, #tpu.memory_space<smem>>
      %c40 = arith.constant 40 : index
      %67 = memref.load %arg2[%c40] : memref<98xf32, #tpu.memory_space<smem>>
      %c41 = arith.constant 41 : index
      %68 = memref.load %arg2[%c41] : memref<98xf32, #tpu.memory_space<smem>>
      %c42 = arith.constant 42 : index
      %69 = memref.load %arg2[%c42] : memref<98xf32, #tpu.memory_space<smem>>
      %c43 = arith.constant 43 : index
      %70 = memref.load %arg2[%c43] : memref<98xf32, #tpu.memory_space<smem>>
      %c44 = arith.constant 44 : index
      %71 = memref.load %arg2[%c44] : memref<98xf32, #tpu.memory_space<smem>>
      %c45 = arith.constant 45 : index
      %72 = memref.load %arg2[%c45] : memref<98xf32, #tpu.memory_space<smem>>
      %c46 = arith.constant 46 : index
      %73 = memref.load %arg2[%c46] : memref<98xf32, #tpu.memory_space<smem>>
      %c47 = arith.constant 47 : index
      %74 = memref.load %arg2[%c47] : memref<98xf32, #tpu.memory_space<smem>>
      %c48 = arith.constant 48 : index
      %75 = memref.load %arg2[%c48] : memref<98xf32, #tpu.memory_space<smem>>
      %c49 = arith.constant 49 : index
      %76 = memref.load %arg2[%c49] : memref<98xf32, #tpu.memory_space<smem>>
      %c50 = arith.constant 50 : index
      %77 = memref.load %arg2[%c50] : memref<98xf32, #tpu.memory_space<smem>>
      %c51 = arith.constant 51 : index
      %78 = memref.load %arg2[%c51] : memref<98xf32, #tpu.memory_space<smem>>
      %c52 = arith.constant 52 : index
      %79 = memref.load %arg2[%c52] : memref<98xf32, #tpu.memory_space<smem>>
      %c53 = arith.constant 53 : index
      %80 = memref.load %arg2[%c53] : memref<98xf32, #tpu.memory_space<smem>>
      %c54 = arith.constant 54 : index
      %81 = memref.load %arg2[%c54] : memref<98xf32, #tpu.memory_space<smem>>
      %c55 = arith.constant 55 : index
      %82 = memref.load %arg2[%c55] : memref<98xf32, #tpu.memory_space<smem>>
      %c56 = arith.constant 56 : index
      %83 = memref.load %arg2[%c56] : memref<98xf32, #tpu.memory_space<smem>>
      %c57 = arith.constant 57 : index
      %84 = memref.load %arg2[%c57] : memref<98xf32, #tpu.memory_space<smem>>
      %c58 = arith.constant 58 : index
      %85 = memref.load %arg2[%c58] : memref<98xf32, #tpu.memory_space<smem>>
      %c59 = arith.constant 59 : index
      %86 = memref.load %arg2[%c59] : memref<98xf32, #tpu.memory_space<smem>>
      %c60 = arith.constant 60 : index
      %87 = memref.load %arg2[%c60] : memref<98xf32, #tpu.memory_space<smem>>
      %c61 = arith.constant 61 : index
      %88 = memref.load %arg2[%c61] : memref<98xf32, #tpu.memory_space<smem>>
      %c62 = arith.constant 62 : index
      %89 = memref.load %arg2[%c62] : memref<98xf32, #tpu.memory_space<smem>>
      %c63 = arith.constant 63 : index
      %90 = memref.load %arg2[%c63] : memref<98xf32, #tpu.memory_space<smem>>
      %c64 = arith.constant 64 : index
      %91 = memref.load %arg2[%c64] : memref<98xf32, #tpu.memory_space<smem>>
      %c65 = arith.constant 65 : index
      %92 = memref.load %arg2[%c65] : memref<98xf32, #tpu.memory_space<smem>>
      %c66 = arith.constant 66 : index
      %93 = memref.load %arg2[%c66] : memref<98xf32, #tpu.memory_space<smem>>
      %c67 = arith.constant 67 : index
      %94 = memref.load %arg2[%c67] : memref<98xf32, #tpu.memory_space<smem>>
      %c68 = arith.constant 68 : index
      %95 = memref.load %arg2[%c68] : memref<98xf32, #tpu.memory_space<smem>>
      %c69 = arith.constant 69 : index
      %96 = memref.load %arg2[%c69] : memref<98xf32, #tpu.memory_space<smem>>
      %c70 = arith.constant 70 : index
      %97 = memref.load %arg2[%c70] : memref<98xf32, #tpu.memory_space<smem>>
      %c71 = arith.constant 71 : index
      %98 = memref.load %arg2[%c71] : memref<98xf32, #tpu.memory_space<smem>>
      %c72 = arith.constant 72 : index
      %99 = memref.load %arg2[%c72] : memref<98xf32, #tpu.memory_space<smem>>
      %c73 = arith.constant 73 : index
      %100 = memref.load %arg2[%c73] : memref<98xf32, #tpu.memory_space<smem>>
      %c74 = arith.constant 74 : index
      %101 = memref.load %arg2[%c74] : memref<98xf32, #tpu.memory_space<smem>>
      %c75 = arith.constant 75 : index
      %102 = memref.load %arg2[%c75] : memref<98xf32, #tpu.memory_space<smem>>
      %c76 = arith.constant 76 : index
      %103 = memref.load %arg2[%c76] : memref<98xf32, #tpu.memory_space<smem>>
      %c77 = arith.constant 77 : index
      %104 = memref.load %arg2[%c77] : memref<98xf32, #tpu.memory_space<smem>>
      %c78 = arith.constant 78 : index
      %105 = memref.load %arg2[%c78] : memref<98xf32, #tpu.memory_space<smem>>
      %c79 = arith.constant 79 : index
      %106 = memref.load %arg2[%c79] : memref<98xf32, #tpu.memory_space<smem>>
      %c80 = arith.constant 80 : index
      %107 = memref.load %arg2[%c80] : memref<98xf32, #tpu.memory_space<smem>>
      %c81 = arith.constant 81 : index
      %108 = memref.load %arg2[%c81] : memref<98xf32, #tpu.memory_space<smem>>
      %c82 = arith.constant 82 : index
      %109 = memref.load %arg2[%c82] : memref<98xf32, #tpu.memory_space<smem>>
      %c83 = arith.constant 83 : index
      %110 = memref.load %arg2[%c83] : memref<98xf32, #tpu.memory_space<smem>>
      %c84 = arith.constant 84 : index
      %111 = memref.load %arg2[%c84] : memref<98xf32, #tpu.memory_space<smem>>
      %c85 = arith.constant 85 : index
      %112 = memref.load %arg2[%c85] : memref<98xf32, #tpu.memory_space<smem>>
      %c86 = arith.constant 86 : index
      %113 = memref.load %arg2[%c86] : memref<98xf32, #tpu.memory_space<smem>>
      %c87 = arith.constant 87 : index
      %114 = memref.load %arg2[%c87] : memref<98xf32, #tpu.memory_space<smem>>
      %c88 = arith.constant 88 : index
      %115 = memref.load %arg2[%c88] : memref<98xf32, #tpu.memory_space<smem>>
      %c89 = arith.constant 89 : index
      %116 = memref.load %arg2[%c89] : memref<98xf32, #tpu.memory_space<smem>>
      %c90 = arith.constant 90 : index
      %117 = memref.load %arg2[%c90] : memref<98xf32, #tpu.memory_space<smem>>
      %c91 = arith.constant 91 : index
      %118 = memref.load %arg2[%c91] : memref<98xf32, #tpu.memory_space<smem>>
      %c92 = arith.constant 92 : index
      %119 = memref.load %arg2[%c92] : memref<98xf32, #tpu.memory_space<smem>>
      %c93 = arith.constant 93 : index
      %120 = memref.load %arg2[%c93] : memref<98xf32, #tpu.memory_space<smem>>
      %c94 = arith.constant 94 : index
      %121 = memref.load %arg2[%c94] : memref<98xf32, #tpu.memory_space<smem>>
      %c95 = arith.constant 95 : index
      %122 = memref.load %arg2[%c95] : memref<98xf32, #tpu.memory_space<smem>>
      %c96 = arith.constant 96 : index
      %123 = memref.load %arg2[%c96] : memref<98xf32, #tpu.memory_space<smem>>
      %c97 = arith.constant 97 : index
      %124 = memref.load %arg2[%c97] : memref<98xf32, #tpu.memory_space<smem>>
      %cst_15 = arith.constant 0.000000e+00 : f32
      %125 = vector.broadcast %cst_15 : f32 to vector<3x22xf32>
      %c0_16 = arith.constant 0 : index
      %c0_17 = arith.constant 0 : index
      %c0_18 = arith.constant 0 : index
      %126 = vector.load %arg7[%c0_16, %c0_17, %c0_18] : memref<2x22x22xf32, #tpu.memory_space<vmem>>, vector<1x3x22xf32>
      %127 = vector.shape_cast %126 : vector<1x3x22xf32> to vector<3x22xf32>
      %128 = vector.shape_cast %125 : vector<3x22xf32> to vector<1x3x22xf32>
      tpu.vector_store %arg7[%c0_16, %c0_17, %c0_18], %128 {strides = array<i32>} : memref<2x22x22xf32, #tpu.memory_space<vmem>>, vector<1x3x22xf32>,
      %cst_19 = arith.constant 0.000000e+00 : f32
      %129 = vector.broadcast %cst_19 : f32 to vector<3x22xf32>
      %c0_20 = arith.constant 0 : index
      %c19_21 = arith.constant 19 : index
      %c0_22 = arith.constant 0 : index
      %130 = vector.load %arg7[%c0_20, %c19_21, %c0_22] : memref<2x22x22xf32, #tpu.memory_space<vmem>>, vector<1x3x22xf32>
      %131 = vector.shape_cast %130 : vector<1x3x22xf32> to vector<3x22xf32>
      %132 = vector.shape_cast %129 : vector<3x22xf32> to vector<1x3x22xf32>
      tpu.vector_store %arg7[%c0_20, %c19_21, %c0_22], %132 {strides = array<i32>} : memref<2x22x22xf32, #tpu.memory_space<vmem>>, vector<1x3x22xf32>,
      %cst_23 = arith.constant 0.000000e+00 : f32
      %133 = vector.broadcast %cst_23 : f32 to vector<16x3xf32>
      %c0_24 = arith.constant 0 : index
      %c3_25 = arith.constant 3 : index
      %c0_26 = arith.constant 0 : index
      %134 = vector.load %arg7[%c0_24, %c3_25, %c0_26] : memref<2x22x22xf32, #tpu.memory_space<vmem>>, vector<1x16x3xf32>
      %135 = vector.shape_cast %134 : vector<1x16x3xf32> to vector<16x3xf32>
      %136 = vector.shape_cast %133 : vector<16x3xf32> to vector<1x16x3xf32>
      tpu.vector_store %arg7[%c0_24, %c3_25, %c0_26], %136 {strides = array<i32>} : memref<2x22x22xf32, #tpu.memory_space<vmem>>, vector<1x16x3xf32>,
      %cst_27 = arith.constant 0.000000e+00 : f32
      %137 = vector.broadcast %cst_27 : f32 to vector<16x3xf32>
      %c0_28 = arith.constant 0 : index
      %c3_29 = arith.constant 3 : index
      %c19_30 = arith.constant 19 : index
      %138 = vector.load %arg7[%c0_28, %c3_29, %c19_30] : memref<2x22x22xf32, #tpu.memory_space<vmem>>, vector<1x16x3xf32>
      %139 = vector.shape_cast %138 : vector<1x16x3xf32> to vector<16x3xf32>
      %140 = vector.shape_cast %137 : vector<16x3xf32> to vector<1x16x3xf32>
      tpu.vector_store %arg7[%c0_28, %c3_29, %c19_30], %140 {strides = array<i32>} : memref<2x22x22xf32, #tpu.memory_space<vmem>>, vector<1x16x3xf32>,
      %cst_31 = arith.constant 0.000000e+00 : f32
      %141 = vector.broadcast %cst_31 : f32 to vector<3x22xf32>
      %c1_32 = arith.constant 1 : index
      %c0_33 = arith.constant 0 : index
      %c0_34 = arith.constant 0 : index
      %142 = vector.load %arg7[%c1_32, %c0_33, %c0_34] : memref<2x22x22xf32, #tpu.memory_space<vmem>>, vector<1x3x22xf32>
      %143 = vector.shape_cast %142 : vector<1x3x22xf32> to vector<3x22xf32>
      %144 = vector.shape_cast %141 : vector<3x22xf32> to vector<1x3x22xf32>
      tpu.vector_store %arg7[%c1_32, %c0_33, %c0_34], %144 {strides = array<i32>} : memref<2x22x22xf32, #tpu.memory_space<vmem>>, vector<1x3x22xf32>,
      %cst_35 = arith.constant 0.000000e+00 : f32
      %145 = vector.broadcast %cst_35 : f32 to vector<3x22xf32>
      %c1_36 = arith.constant 1 : index
      %c19_37 = arith.constant 19 : index
      %c0_38 = arith.constant 0 : index
      %146 = vector.load %arg7[%c1_36, %c19_37, %c0_38] : memref<2x22x22xf32, #tpu.memory_space<vmem>>, vector<1x3x22xf32>
      %147 = vector.shape_cast %146 : vector<1x3x22xf32> to vector<3x22xf32>
      %148 = vector.shape_cast %145 : vector<3x22xf32> to vector<1x3x22xf32>
      tpu.vector_store %arg7[%c1_36, %c19_37, %c0_38], %148 {strides = array<i32>} : memref<2x22x22xf32, #tpu.memory_space<vmem>>, vector<1x3x22xf32>,
      %cst_39 = arith.constant 0.000000e+00 : f32
      %149 = vector.broadcast %cst_39 : f32 to vector<16x3xf32>
      %c1_40 = arith.constant 1 : index
      %c3_41 = arith.constant 3 : index
      %c0_42 = arith.constant 0 : index
      %150 = vector.load %arg7[%c1_40, %c3_41, %c0_42] : memref<2x22x22xf32, #tpu.memory_space<vmem>>, vector<1x16x3xf32>
      %151 = vector.shape_cast %150 : vector<1x16x3xf32> to vector<16x3xf32>
      %152 = vector.shape_cast %149 : vector<16x3xf32> to vector<1x16x3xf32>
      tpu.vector_store %arg7[%c1_40, %c3_41, %c0_42], %152 {strides = array<i32>} : memref<2x22x22xf32, #tpu.memory_space<vmem>>, vector<1x16x3xf32>,
      %cst_43 = arith.constant 0.000000e+00 : f32
      %153 = vector.broadcast %cst_43 : f32 to vector<16x3xf32>
      %c1_44 = arith.constant 1 : index
      %c3_45 = arith.constant 3 : index
      %c19_46 = arith.constant 19 : index
      %154 = vector.load %arg7[%c1_44, %c3_45, %c19_46] : memref<2x22x22xf32, #tpu.memory_space<vmem>>, vector<1x16x3xf32>
      %155 = vector.shape_cast %154 : vector<1x16x3xf32> to vector<16x3xf32>
      %156 = vector.shape_cast %153 : vector<16x3xf32> to vector<1x16x3xf32>
      tpu.vector_store %arg7[%c1_44, %c3_45, %c19_46], %156 {strides = array<i32>} : memref<2x22x22xf32, #tpu.memory_space<vmem>>, vector<1x16x3xf32>,
      %c0_i32_47 = arith.constant 0 : i32
      %157 = arith.index_cast %c0_i32_47 : i32 to index
      %c0_48 = arith.constant 0 : index
      %c0_49 = arith.constant 0 : index
      %158 = vector.load %arg5[%157, %c0_48, %c0_49] : memref<1x16x16xf32, #tpu.memory_space<vmem>>, vector<1x16x16xf32>
      %159 = vector.shape_cast %158 : vector<1x16x16xf32> to vector<16x16xf32>
      %c0_50 = arith.constant 0 : index
      %c3_51 = arith.constant 3 : index
      %c3_52 = arith.constant 3 : index
      %160 = vector.load %arg7[%c0_50, %c3_51, %c3_52] : memref<2x22x22xf32, #tpu.memory_space<vmem>>, vector<1x16x16xf32>
      %161 = vector.shape_cast %160 : vector<1x16x16xf32> to vector<16x16xf32>
      %162 = vector.shape_cast %159 : vector<16x16xf32> to vector<1x16x16xf32>
      tpu.vector_store %arg7[%c0_50, %c3_51, %c3_52], %162 {strides = array<i32>} : memref<2x22x22xf32, #tpu.memory_space<vmem>>, vector<1x16x16xf32>,
      %163 = arith.index_cast %c0_i32_47 : i32 to index
      %c0_53 = arith.constant 0 : index
      %c0_54 = arith.constant 0 : index
      %164 = vector.load %arg6[%163, %c0_53, %c0_54] : memref<1x16x16xf32, #tpu.memory_space<vmem>>, vector<1x16x16xf32>
      %165 = vector.shape_cast %164 : vector<1x16x16xf32> to vector<16x16xf32>
      %c1_55 = arith.constant 1 : index
      %c3_56 = arith.constant 3 : index
      %c3_57 = arith.constant 3 : index
      %166 = vector.load %arg7[%c1_55, %c3_56, %c3_57] : memref<2x22x22xf32, #tpu.memory_space<vmem>>, vector<1x16x16xf32>
      %167 = vector.shape_cast %166 : vector<1x16x16xf32> to vector<16x16xf32>
      %168 = vector.shape_cast %165 : vector<16x16xf32> to vector<1x16x16xf32>
      tpu.vector_store %arg7[%c1_55, %c3_56, %c3_57], %168 {strides = array<i32>} : memref<2x22x22xf32, #tpu.memory_space<vmem>>, vector<1x16x16xf32>,
      %cst_58 = arith.constant 0.000000e+00 : f32
      %169 = vector.broadcast %cst_58 : f32 to vector<16x16xf32>
      %c0_59 = arith.constant 0 : index
      %c0_60 = arith.constant 0 : index
      %c0_61 = arith.constant 0 : index
      %170 = vector.load %arg7[%c0_59, %c0_60, %c0_61] : memref<2x22x22xf32, #tpu.memory_space<vmem>>, vector<1x22x16xf32>
      %171 = vector.shape_cast %170 : vector<1x22x16xf32> to vector<22x16xf32>
      %c0_62 = arith.constant 0 : index
      %c0_63 = arith.constant 0 : index
      %c1_64 = arith.constant 1 : index
      %172 = vector.load %arg7[%c0_62, %c0_63, %c1_64] : memref<2x22x22xf32, #tpu.memory_space<vmem>>, vector<1x22x16xf32>
      %173 = vector.shape_cast %172 : vector<1x22x16xf32> to vector<22x16xf32>
      %c0_65 = arith.constant 0 : index
      %c0_66 = arith.constant 0 : index
      %c2_67 = arith.constant 2 : index
      %174 = vector.load %arg7[%c0_65, %c0_66, %c2_67] : memref<2x22x22xf32, #tpu.memory_space<vmem>>, vector<1x22x16xf32>
      %175 = vector.shape_cast %174 : vector<1x22x16xf32> to vector<22x16xf32>
      %c0_68 = arith.constant 0 : index
      %c0_69 = arith.constant 0 : index
      %c3_70 = arith.constant 3 : index
      %176 = vector.load %arg7[%c0_68, %c0_69, %c3_70] : memref<2x22x22xf32, #tpu.memory_space<vmem>>, vector<1x22x16xf32>
      %177 = vector.shape_cast %176 : vector<1x22x16xf32> to vector<22x16xf32>
      %c0_71 = arith.constant 0 : index
      %c0_72 = arith.constant 0 : index
      %c4_73 = arith.constant 4 : index
      %178 = vector.load %arg7[%c0_71, %c0_72, %c4_73] : memref<2x22x22xf32, #tpu.memory_space<vmem>>, vector<1x22x16xf32>
      %179 = vector.shape_cast %178 : vector<1x22x16xf32> to vector<22x16xf32>
      %c0_74 = arith.constant 0 : index
      %c0_75 = arith.constant 0 : index
      %c5_76 = arith.constant 5 : index
      %180 = vector.load %arg7[%c0_74, %c0_75, %c5_76] : memref<2x22x22xf32, #tpu.memory_space<vmem>>, vector<1x22x16xf32>
      %181 = vector.shape_cast %180 : vector<1x22x16xf32> to vector<22x16xf32>
      %c0_77 = arith.constant 0 : index
      %c0_78 = arith.constant 0 : index
      %c6_79 = arith.constant 6 : index
      %182 = vector.load %arg7[%c0_77, %c0_78, %c6_79] : memref<2x22x22xf32, #tpu.memory_space<vmem>>, vector<1x22x16xf32>
      %183 = vector.shape_cast %182 : vector<1x22x16xf32> to vector<22x16xf32>
      %184 = vector.broadcast %27 : f32 to vector<22x16xf32>
      %185 = arith.mulf %171, %184 : vector<22x16xf32>
      %186 = vector.broadcast %28 : f32 to vector<22x16xf32>
      %187 = arith.mulf %173, %186 : vector<22x16xf32>
      %188 = arith.addf %185, %187 : vector<22x16xf32>
      %189 = vector.broadcast %29 : f32 to vector<22x16xf32>
      %190 = arith.mulf %175, %189 : vector<22x16xf32>
      %191 = arith.addf %188, %190 : vector<22x16xf32>
      %192 = vector.broadcast %30 : f32 to vector<22x16xf32>
      %193 = arith.mulf %177, %192 : vector<22x16xf32>
      %194 = arith.addf %191, %193 : vector<22x16xf32>
      %195 = vector.broadcast %31 : f32 to vector<22x16xf32>
      %196 = arith.mulf %179, %195 : vector<22x16xf32>
      %197 = arith.addf %194, %196 : vector<22x16xf32>
      %198 = vector.broadcast %32 : f32 to vector<22x16xf32>
      %199 = arith.mulf %181, %198 : vector<22x16xf32>
      %200 = arith.addf %197, %199 : vector<22x16xf32>
      %201 = vector.broadcast %33 : f32 to vector<22x16xf32>
      %202 = arith.mulf %183, %201 : vector<22x16xf32>
      %203 = arith.addf %200, %202 : vector<22x16xf32>
      %204 = vector.extract_strided_slice %203 {offsets = [0, 0], sizes = [16, 16], strides = [1, 1]} : vector<22x16xf32> to vector<16x16xf32>
      %205 = arith.addf %169, %204 : vector<16x16xf32>
      %206 = vector.broadcast %34 : f32 to vector<22x16xf32>
      %207 = arith.mulf %171, %206 : vector<22x16xf32>
      %208 = vector.broadcast %35 : f32 to vector<22x16xf32>
      %209 = arith.mulf %173, %208 : vector<22x16xf32>
      %210 = arith.addf %207, %209 : vector<22x16xf32>
      %211 = vector.broadcast %36 : f32 to vector<22x16xf32>
      %212 = arith.mulf %175, %211 : vector<22x16xf32>
      %213 = arith.addf %210, %212 : vector<22x16xf32>
      %214 = vector.broadcast %37 : f32 to vector<22x16xf32>
      %215 = arith.mulf %177, %214 : vector<22x16xf32>
      %216 = arith.addf %213, %215 : vector<22x16xf32>
      %217 = vector.broadcast %38 : f32 to vector<22x16xf32>
      %218 = arith.mulf %179, %217 : vector<22x16xf32>
      %219 = arith.addf %216, %218 : vector<22x16xf32>
      %220 = vector.broadcast %39 : f32 to vector<22x16xf32>
      %221 = arith.mulf %181, %220 : vector<22x16xf32>
      %222 = arith.addf %219, %221 : vector<22x16xf32>
      %223 = vector.broadcast %40 : f32 to vector<22x16xf32>
      %224 = arith.mulf %183, %223 : vector<22x16xf32>
      %225 = arith.addf %222, %224 : vector<22x16xf32>
      %226 = vector.extract_strided_slice %225 {offsets = [1, 0], sizes = [16, 16], strides = [1, 1]} : vector<22x16xf32> to vector<16x16xf32>
      %227 = arith.addf %205, %226 : vector<16x16xf32>
      %228 = vector.broadcast %41 : f32 to vector<22x16xf32>
      %229 = arith.mulf %171, %228 : vector<22x16xf32>
      %230 = vector.broadcast %42 : f32 to vector<22x16xf32>
      %231 = arith.mulf %173, %230 : vector<22x16xf32>
      %232 = arith.addf %229, %231 : vector<22x16xf32>
      %233 = vector.broadcast %43 : f32 to vector<22x16xf32>
      %234 = arith.mulf %175, %233 : vector<22x16xf32>
      %235 = arith.addf %232, %234 : vector<22x16xf32>
      %236 = vector.broadcast %44 : f32 to vector<22x16xf32>
      %237 = arith.mulf %177, %236 : vector<22x16xf32>
      %238 = arith.addf %235, %237 : vector<22x16xf32>
      %239 = vector.broadcast %45 : f32 to vector<22x16xf32>
      %240 = arith.mulf %179, %239 : vector<22x16xf32>
      %241 = arith.addf %238, %240 : vector<22x16xf32>
      %242 = vector.broadcast %46 : f32 to vector<22x16xf32>
      %243 = arith.mulf %181, %242 : vector<22x16xf32>
      %244 = arith.addf %241, %243 : vector<22x16xf32>
      %245 = vector.broadcast %47 : f32 to vector<22x16xf32>
      %246 = arith.mulf %183, %245 : vector<22x16xf32>
      %247 = arith.addf %244, %246 : vector<22x16xf32>
      %248 = vector.extract_strided_slice %247 {offsets = [2, 0], sizes = [16, 16], strides = [1, 1]} : vector<22x16xf32> to vector<16x16xf32>
      %249 = arith.addf %227, %248 : vector<16x16xf32>
      %250 = vector.broadcast %48 : f32 to vector<22x16xf32>
      %251 = arith.mulf %171, %250 : vector<22x16xf32>
      %252 = vector.broadcast %49 : f32 to vector<22x16xf32>
      %253 = arith.mulf %173, %252 : vector<22x16xf32>
      %254 = arith.addf %251, %253 : vector<22x16xf32>
      %255 = vector.broadcast %50 : f32 to vector<22x16xf32>
      %256 = arith.mulf %175, %255 : vector<22x16xf32>
      %257 = arith.addf %254, %256 : vector<22x16xf32>
      %258 = vector.broadcast %51 : f32 to vector<22x16xf32>
      %259 = arith.mulf %177, %258 : vector<22x16xf32>
      %260 = arith.addf %257, %259 : vector<22x16xf32>
      %261 = vector.broadcast %52 : f32 to vector<22x16xf32>
      %262 = arith.mulf %179, %261 : vector<22x16xf32>
      %263 = arith.addf %260, %262 : vector<22x16xf32>
      %264 = vector.broadcast %53 : f32 to vector<22x16xf32>
      %265 = arith.mulf %181, %264 : vector<22x16xf32>
      %266 = arith.addf %263, %265 : vector<22x16xf32>
      %267 = vector.broadcast %54 : f32 to vector<22x16xf32>
      %268 = arith.mulf %183, %267 : vector<22x16xf32>
      %269 = arith.addf %266, %268 : vector<22x16xf32>
      %270 = vector.extract_strided_slice %269 {offsets = [3, 0], sizes = [16, 16], strides = [1, 1]} : vector<22x16xf32> to vector<16x16xf32>
      %271 = arith.addf %249, %270 : vector<16x16xf32>
      %272 = vector.broadcast %55 : f32 to vector<22x16xf32>
      %273 = arith.mulf %171, %272 : vector<22x16xf32>
      %274 = vector.broadcast %56 : f32 to vector<22x16xf32>
      %275 = arith.mulf %173, %274 : vector<22x16xf32>
      %276 = arith.addf %273, %275 : vector<22x16xf32>
      %277 = vector.broadcast %57 : f32 to vector<22x16xf32>
      %278 = arith.mulf %175, %277 : vector<22x16xf32>
      %279 = arith.addf %276, %278 : vector<22x16xf32>
      %280 = vector.broadcast %58 : f32 to vector<22x16xf32>
      %281 = arith.mulf %177, %280 : vector<22x16xf32>
      %282 = arith.addf %279, %281 : vector<22x16xf32>
      %283 = vector.broadcast %59 : f32 to vector<22x16xf32>
      %284 = arith.mulf %179, %283 : vector<22x16xf32>
      %285 = arith.addf %282, %284 : vector<22x16xf32>
      %286 = vector.broadcast %60 : f32 to vector<22x16xf32>
      %287 = arith.mulf %181, %286 : vector<22x16xf32>
      %288 = arith.addf %285, %287 : vector<22x16xf32>
      %289 = vector.broadcast %61 : f32 to vector<22x16xf32>
      %290 = arith.mulf %183, %289 : vector<22x16xf32>
      %291 = arith.addf %288, %290 : vector<22x16xf32>
      %292 = vector.extract_strided_slice %291 {offsets = [4, 0], sizes = [16, 16], strides = [1, 1]} : vector<22x16xf32> to vector<16x16xf32>
      %293 = arith.addf %271, %292 : vector<16x16xf32>
      %294 = vector.broadcast %62 : f32 to vector<22x16xf32>
      %295 = arith.mulf %171, %294 : vector<22x16xf32>
      %296 = vector.broadcast %63 : f32 to vector<22x16xf32>
      %297 = arith.mulf %173, %296 : vector<22x16xf32>
      %298 = arith.addf %295, %297 : vector<22x16xf32>
      %299 = vector.broadcast %64 : f32 to vector<22x16xf32>
      %300 = arith.mulf %175, %299 : vector<22x16xf32>
      %301 = arith.addf %298, %300 : vector<22x16xf32>
      %302 = vector.broadcast %65 : f32 to vector<22x16xf32>
      %303 = arith.mulf %177, %302 : vector<22x16xf32>
      %304 = arith.addf %301, %303 : vector<22x16xf32>
      %305 = vector.broadcast %66 : f32 to vector<22x16xf32>
      %306 = arith.mulf %179, %305 : vector<22x16xf32>
      %307 = arith.addf %304, %306 : vector<22x16xf32>
      %308 = vector.broadcast %67 : f32 to vector<22x16xf32>
      %309 = arith.mulf %181, %308 : vector<22x16xf32>
      %310 = arith.addf %307, %309 : vector<22x16xf32>
      %311 = vector.broadcast %68 : f32 to vector<22x16xf32>
      %312 = arith.mulf %183, %311 : vector<22x16xf32>
      %313 = arith.addf %310, %312 : vector<22x16xf32>
      %314 = vector.extract_strided_slice %313 {offsets = [5, 0], sizes = [16, 16], strides = [1, 1]} : vector<22x16xf32> to vector<16x16xf32>
      %315 = arith.addf %293, %314 : vector<16x16xf32>
      %316 = vector.broadcast %69 : f32 to vector<22x16xf32>
      %317 = arith.mulf %171, %316 : vector<22x16xf32>
      %318 = vector.broadcast %70 : f32 to vector<22x16xf32>
      %319 = arith.mulf %173, %318 : vector<22x16xf32>
      %320 = arith.addf %317, %319 : vector<22x16xf32>
      %321 = vector.broadcast %71 : f32 to vector<22x16xf32>
      %322 = arith.mulf %175, %321 : vector<22x16xf32>
      %323 = arith.addf %320, %322 : vector<22x16xf32>
      %324 = vector.broadcast %72 : f32 to vector<22x16xf32>
      %325 = arith.mulf %177, %324 : vector<22x16xf32>
      %326 = arith.addf %323, %325 : vector<22x16xf32>
      %327 = vector.broadcast %73 : f32 to vector<22x16xf32>
      %328 = arith.mulf %179, %327 : vector<22x16xf32>
      %329 = arith.addf %326, %328 : vector<22x16xf32>
      %330 = vector.broadcast %74 : f32 to vector<22x16xf32>
      %331 = arith.mulf %181, %330 : vector<22x16xf32>
      %332 = arith.addf %329, %331 : vector<22x16xf32>
      %333 = vector.broadcast %75 : f32 to vector<22x16xf32>
      %334 = arith.mulf %183, %333 : vector<22x16xf32>
      %335 = arith.addf %332, %334 : vector<22x16xf32>
      %336 = vector.extract_strided_slice %335 {offsets = [6, 0], sizes = [16, 16], strides = [1, 1]} : vector<22x16xf32> to vector<16x16xf32>
      %337 = arith.addf %315, %336 : vector<16x16xf32>
      %c1_80 = arith.constant 1 : index
      %c0_81 = arith.constant 0 : index
      %c0_82 = arith.constant 0 : index
      %338 = vector.load %arg7[%c1_80, %c0_81, %c0_82] : memref<2x22x22xf32, #tpu.memory_space<vmem>>, vector<1x22x16xf32>
      %339 = vector.shape_cast %338 : vector<1x22x16xf32> to vector<22x16xf32>
      %c1_83 = arith.constant 1 : index
      %c0_84 = arith.constant 0 : index
      %c1_85 = arith.constant 1 : index
      %340 = vector.load %arg7[%c1_83, %c0_84, %c1_85] : memref<2x22x22xf32, #tpu.memory_space<vmem>>, vector<1x22x16xf32>
      %341 = vector.shape_cast %340 : vector<1x22x16xf32> to vector<22x16xf32>
      %c1_86 = arith.constant 1 : index
      %c0_87 = arith.constant 0 : index
      %c2_88 = arith.constant 2 : index
      %342 = vector.load %arg7[%c1_86, %c0_87, %c2_88] : memref<2x22x22xf32, #tpu.memory_space<vmem>>, vector<1x22x16xf32>
      %343 = vector.shape_cast %342 : vector<1x22x16xf32> to vector<22x16xf32>
      %c1_89 = arith.constant 1 : index
      %c0_90 = arith.constant 0 : index
      %c3_91 = arith.constant 3 : index
      %344 = vector.load %arg7[%c1_89, %c0_90, %c3_91] : memref<2x22x22xf32, #tpu.memory_space<vmem>>, vector<1x22x16xf32>
      %345 = vector.shape_cast %344 : vector<1x22x16xf32> to vector<22x16xf32>
      %c1_92 = arith.constant 1 : index
      %c0_93 = arith.constant 0 : index
      %c4_94 = arith.constant 4 : index
      %346 = vector.load %arg7[%c1_92, %c0_93, %c4_94] : memref<2x22x22xf32, #tpu.memory_space<vmem>>, vector<1x22x16xf32>
      %347 = vector.shape_cast %346 : vector<1x22x16xf32> to vector<22x16xf32>
      %c1_95 = arith.constant 1 : index
      %c0_96 = arith.constant 0 : index
      %c5_97 = arith.constant 5 : index
      %348 = vector.load %arg7[%c1_95, %c0_96, %c5_97] : memref<2x22x22xf32, #tpu.memory_space<vmem>>, vector<1x22x16xf32>
      %349 = vector.shape_cast %348 : vector<1x22x16xf32> to vector<22x16xf32>
      %c1_98 = arith.constant 1 : index
      %c0_99 = arith.constant 0 : index
      %c6_100 = arith.constant 6 : index
      %350 = vector.load %arg7[%c1_98, %c0_99, %c6_100] : memref<2x22x22xf32, #tpu.memory_space<vmem>>, vector<1x22x16xf32>
      %351 = vector.shape_cast %350 : vector<1x22x16xf32> to vector<22x16xf32>
      %352 = vector.broadcast %76 : f32 to vector<22x16xf32>
      %353 = arith.mulf %339, %352 : vector<22x16xf32>
      %354 = vector.broadcast %77 : f32 to vector<22x16xf32>
      %355 = arith.mulf %341, %354 : vector<22x16xf32>
      %356 = arith.addf %353, %355 : vector<22x16xf32>
      %357 = vector.broadcast %78 : f32 to vector<22x16xf32>
      %358 = arith.mulf %343, %357 : vector<22x16xf32>
      %359 = arith.addf %356, %358 : vector<22x16xf32>
      %360 = vector.broadcast %79 : f32 to vector<22x16xf32>
      %361 = arith.mulf %345, %360 : vector<22x16xf32>
      %362 = arith.addf %359, %361 : vector<22x16xf32>
      %363 = vector.broadcast %80 : f32 to vector<22x16xf32>
      %364 = arith.mulf %347, %363 : vector<22x16xf32>
      %365 = arith.addf %362, %364 : vector<22x16xf32>
      %366 = vector.broadcast %81 : f32 to vector<22x16xf32>
      %367 = arith.mulf %349, %366 : vector<22x16xf32>
      %368 = arith.addf %365, %367 : vector<22x16xf32>
      %369 = vector.broadcast %82 : f32 to vector<22x16xf32>
      %370 = arith.mulf %351, %369 : vector<22x16xf32>
      %371 = arith.addf %368, %370 : vector<22x16xf32>
      %372 = vector.extract_strided_slice %371 {offsets = [0, 0], sizes = [16, 16], strides = [1, 1]} : vector<22x16xf32> to vector<16x16xf32>
      %373 = arith.addf %337, %372 : vector<16x16xf32>
      %374 = vector.broadcast %83 : f32 to vector<22x16xf32>
      %375 = arith.mulf %339, %374 : vector<22x16xf32>
      %376 = vector.broadcast %84 : f32 to vector<22x16xf32>
      %377 = arith.mulf %341, %376 : vector<22x16xf32>
      %378 = arith.addf %375, %377 : vector<22x16xf32>
      %379 = vector.broadcast %85 : f32 to vector<22x16xf32>
      %380 = arith.mulf %343, %379 : vector<22x16xf32>
      %381 = arith.addf %378, %380 : vector<22x16xf32>
      %382 = vector.broadcast %86 : f32 to vector<22x16xf32>
      %383 = arith.mulf %345, %382 : vector<22x16xf32>
      %384 = arith.addf %381, %383 : vector<22x16xf32>
      %385 = vector.broadcast %87 : f32 to vector<22x16xf32>
      %386 = arith.mulf %347, %385 : vector<22x16xf32>
      %387 = arith.addf %384, %386 : vector<22x16xf32>
      %388 = vector.broadcast %88 : f32 to vector<22x16xf32>
      %389 = arith.mulf %349, %388 : vector<22x16xf32>
      %390 = arith.addf %387, %389 : vector<22x16xf32>
      %391 = vector.broadcast %89 : f32 to vector<22x16xf32>
      %392 = arith.mulf %351, %391 : vector<22x16xf32>
      %393 = arith.addf %390, %392 : vector<22x16xf32>
      %394 = vector.extract_strided_slice %393 {offsets = [1, 0], sizes = [16, 16], strides = [1, 1]} : vector<22x16xf32> to vector<16x16xf32>
      %395 = arith.addf %373, %394 : vector<16x16xf32>
      %396 = vector.broadcast %90 : f32 to vector<22x16xf32>
      %397 = arith.mulf %339, %396 : vector<22x16xf32>
      %398 = vector.broadcast %91 : f32 to vector<22x16xf32>
      %399 = arith.mulf %341, %398 : vector<22x16xf32>
      %400 = arith.addf %397, %399 : vector<22x16xf32>
      %401 = vector.broadcast %92 : f32 to vector<22x16xf32>
      %402 = arith.mulf %343, %401 : vector<22x16xf32>
      %403 = arith.addf %400, %402 : vector<22x16xf32>
      %404 = vector.broadcast %93 : f32 to vector<22x16xf32>
      %405 = arith.mulf %345, %404 : vector<22x16xf32>
      %406 = arith.addf %403, %405 : vector<22x16xf32>
      %407 = vector.broadcast %94 : f32 to vector<22x16xf32>
      %408 = arith.mulf %347, %407 : vector<22x16xf32>
      %409 = arith.addf %406, %408 : vector<22x16xf32>
      %410 = vector.broadcast %95 : f32 to vector<22x16xf32>
      %411 = arith.mulf %349, %410 : vector<22x16xf32>
      %412 = arith.addf %409, %411 : vector<22x16xf32>
      %413 = vector.broadcast %96 : f32 to vector<22x16xf32>
      %414 = arith.mulf %351, %413 : vector<22x16xf32>
      %415 = arith.addf %412, %414 : vector<22x16xf32>
      %416 = vector.extract_strided_slice %415 {offsets = [2, 0], sizes = [16, 16], strides = [1, 1]} : vector<22x16xf32> to vector<16x16xf32>
      %417 = arith.addf %395, %416 : vector<16x16xf32>
      %418 = vector.broadcast %97 : f32 to vector<22x16xf32>
      %419 = arith.mulf %339, %418 : vector<22x16xf32>
      %420 = vector.broadcast %98 : f32 to vector<22x16xf32>
      %421 = arith.mulf %341, %420 : vector<22x16xf32>
      %422 = arith.addf %419, %421 : vector<22x16xf32>
      %423 = vector.broadcast %99 : f32 to vector<22x16xf32>
      %424 = arith.mulf %343, %423 : vector<22x16xf32>
      %425 = arith.addf %422, %424 : vector<22x16xf32>
      %426 = vector.broadcast %100 : f32 to vector<22x16xf32>
      %427 = arith.mulf %345, %426 : vector<22x16xf32>
      %428 = arith.addf %425, %427 : vector<22x16xf32>
      %429 = vector.broadcast %101 : f32 to vector<22x16xf32>
      %430 = arith.mulf %347, %429 : vector<22x16xf32>
      %431 = arith.addf %428, %430 : vector<22x16xf32>
      %432 = vector.broadcast %102 : f32 to vector<22x16xf32>
      %433 = arith.mulf %349, %432 : vector<22x16xf32>
      %434 = arith.addf %431, %433 : vector<22x16xf32>
      %435 = vector.broadcast %103 : f32 to vector<22x16xf32>
      %436 = arith.mulf %351, %435 : vector<22x16xf32>
      %437 = arith.addf %434, %436 : vector<22x16xf32>
      %438 = vector.extract_strided_slice %437 {offsets = [3, 0], sizes = [16, 16], strides = [1, 1]} : vector<22x16xf32> to vector<16x16xf32>
      %439 = arith.addf %417, %438 : vector<16x16xf32>
      %440 = vector.broadcast %104 : f32 to vector<22x16xf32>
      %441 = arith.mulf %339, %440 : vector<22x16xf32>
      %442 = vector.broadcast %105 : f32 to vector<22x16xf32>
      %443 = arith.mulf %341, %442 : vector<22x16xf32>
      %444 = arith.addf %441, %443 : vector<22x16xf32>
      %445 = vector.broadcast %106 : f32 to vector<22x16xf32>
      %446 = arith.mulf %343, %445 : vector<22x16xf32>
      %447 = arith.addf %444, %446 : vector<22x16xf32>
      %448 = vector.broadcast %107 : f32 to vector<22x16xf32>
      %449 = arith.mulf %345, %448 : vector<22x16xf32>
      %450 = arith.addf %447, %449 : vector<22x16xf32>
      %451 = vector.broadcast %108 : f32 to vector<22x16xf32>
      %452 = arith.mulf %347, %451 : vector<22x16xf32>
      %453 = arith.addf %450, %452 : vector<22x16xf32>
      %454 = vector.broadcast %109 : f32 to vector<22x16xf32>
      %455 = arith.mulf %349, %454 : vector<22x16xf32>
      %456 = arith.addf %453, %455 : vector<22x16xf32>
      %457 = vector.broadcast %110 : f32 to vector<22x16xf32>
      %458 = arith.mulf %351, %457 : vector<22x16xf32>
      %459 = arith.addf %456, %458 : vector<22x16xf32>
      %460 = vector.extract_strided_slice %459 {offsets = [4, 0], sizes = [16, 16], strides = [1, 1]} : vector<22x16xf32> to vector<16x16xf32>
      %461 = arith.addf %439, %460 : vector<16x16xf32>
      %462 = vector.broadcast %111 : f32 to vector<22x16xf32>
      %463 = arith.mulf %339, %462 : vector<22x16xf32>
      %464 = vector.broadcast %112 : f32 to vector<22x16xf32>
      %465 = arith.mulf %341, %464 : vector<22x16xf32>
      %466 = arith.addf %463, %465 : vector<22x16xf32>
      %467 = vector.broadcast %113 : f32 to vector<22x16xf32>
      %468 = arith.mulf %343, %467 : vector<22x16xf32>
      %469 = arith.addf %466, %468 : vector<22x16xf32>
      %470 = vector.broadcast %114 : f32 to vector<22x16xf32>
      %471 = arith.mulf %345, %470 : vector<22x16xf32>
      %472 = arith.addf %469, %471 : vector<22x16xf32>
      %473 = vector.broadcast %115 : f32 to vector<22x16xf32>
      %474 = arith.mulf %347, %473 : vector<22x16xf32>
      %475 = arith.addf %472, %474 : vector<22x16xf32>
      %476 = vector.broadcast %116 : f32 to vector<22x16xf32>
      %477 = arith.mulf %349, %476 : vector<22x16xf32>
      %478 = arith.addf %475, %477 : vector<22x16xf32>
      %479 = vector.broadcast %117 : f32 to vector<22x16xf32>
      %480 = arith.mulf %351, %479 : vector<22x16xf32>
      %481 = arith.addf %478, %480 : vector<22x16xf32>
      %482 = vector.extract_strided_slice %481 {offsets = [5, 0], sizes = [16, 16], strides = [1, 1]} : vector<22x16xf32> to vector<16x16xf32>
      %483 = arith.addf %461, %482 : vector<16x16xf32>
      %484 = vector.broadcast %118 : f32 to vector<22x16xf32>
      %485 = arith.mulf %339, %484 : vector<22x16xf32>
      %486 = vector.broadcast %119 : f32 to vector<22x16xf32>
      %487 = arith.mulf %341, %486 : vector<22x16xf32>
      %488 = arith.addf %485, %487 : vector<22x16xf32>
      %489 = vector.broadcast %120 : f32 to vector<22x16xf32>
      %490 = arith.mulf %343, %489 : vector<22x16xf32>
      %491 = arith.addf %488, %490 : vector<22x16xf32>
      %492 = vector.broadcast %121 : f32 to vector<22x16xf32>
      %493 = arith.mulf %345, %492 : vector<22x16xf32>
      %494 = arith.addf %491, %493 : vector<22x16xf32>
      %495 = vector.broadcast %122 : f32 to vector<22x16xf32>
      %496 = arith.mulf %347, %495 : vector<22x16xf32>
      %497 = arith.addf %494, %496 : vector<22x16xf32>
      %498 = vector.broadcast %123 : f32 to vector<22x16xf32>
      %499 = arith.mulf %349, %498 : vector<22x16xf32>
      %500 = arith.addf %497, %499 : vector<22x16xf32>
      %501 = vector.broadcast %124 : f32 to vector<22x16xf32>
      %502 = arith.mulf %351, %501 : vector<22x16xf32>
      %503 = arith.addf %500, %502 : vector<22x16xf32>
      %504 = vector.extract_strided_slice %503 {offsets = [6, 0], sizes = [16, 16], strides = [1, 1]} : vector<22x16xf32> to vector<16x16xf32>
      %505 = arith.addf %483, %504 : vector<16x16xf32>
      %506 = arith.negf %505 : vector<16x16xf32>
      %507 = math.exp %506 : vector<16x16xf32>
      %cst_101 = arith.constant 1.000000e+00 : f32
      %508 = vector.broadcast %cst_101 : f32 to vector<16x16xf32>
      %509 = arith.addf %508, %507 : vector<16x16xf32>
      %510 = arith.divf %508, %509 : vector<16x16xf32>
      %511 = arith.index_cast %c0_i32_47 : i32 to index
      %c0_102 = arith.constant 0 : index
      %c0_103 = arith.constant 0 : index
      %512 = vector.load %arg4[%511, %c0_102, %c0_103] : memref<1x16x16xf32, #tpu.memory_space<vmem>>, vector<1x16x16xf32>
      %513 = vector.shape_cast %512 : vector<1x16x16xf32> to vector<16x16xf32>
      %514 = vector.shape_cast %510 : vector<16x16xf32> to vector<1x16x16xf32>
      tpu.vector_store %arg4[%511, %c0_102, %c0_103], %514 {strides = array<i32>} : memref<1x16x16xf32, #tpu.memory_space<vmem>>, vector<1x16x16xf32>,
      %c1_i32_104 = arith.constant 1 : i32
    } else {
    }
    return
  }
  func.func @transform_0(%arg0: i32, %arg1: i32) -> i32 {
    %c0_i32 = arith.constant 0 : i32
    %c0_i32_0 = arith.constant 0 : i32
    return %c0_i32 : i32
  }
  func.func @transform_1(%arg0: i32, %arg1: i32) -> (i32, i32, i32, i32) {
    %c0_i32 = arith.constant 0 : i32
    %c0_i32_0 = arith.constant 0 : i32
    %c0_i32_1 = arith.constant 0 : i32
    return %arg0, %arg1, %c0_i32, %c0_i32_0 : i32, i32, i32, i32
  }
  func.func @transform_2(%arg0: i32, %arg1: i32) -> (i32, i32, i32) {
    %c0_i32 = arith.constant 0 : i32
    %c0_i32_0 = arith.constant 0 : i32
    %c0_i32_1 = arith.constant 0 : i32
    return %arg0, %c0_i32, %c0_i32_0 : i32, i32, i32
  }
}

</mosaic_0001>

<llo_original>
// kernel: tpu_custom_call.1
$region0: #{tpu_custom_call.1}
  #allocation0 [shape = 'u32[]', space=smem, size = 0x4, offset = 0x4, fixed_abs, tag = 'smem constant byte address 0x4 - core index']
  #allocation1 [shape = 'u32[144,128]{1,0:T(1,128)}', space=vmem, size = 0x12000, scoped, tag = 'internal scratch']
  #allocation2 [shape = 'f32[1,16,16]{2,1,0:T(8,128)}', space=vmem, size = 0x2000, scoped, tag = 'scratch operand']
  #allocation3 [shape = 'f32[1,16,16]{2,1,0:T(8,128)}', space=vmem, size = 0x2000, scoped, tag = 'scratch operand']
  #allocation4 [shape = 'f32[2,22,22]{2,1,0:T(8,128)}', space=vmem, size = 0x6000, scoped, tag = 'scratch operand']
  %s0 = inlined_call_operand.hbm [shape: f32[98], index: 0, kind: input, shape index: {}]
  %s1 = inlined_call_operand.hbm [shape: f32[2,4,16,16], index: 1, kind: input, shape index: {}]
  %s2 = inlined_call_operand.hbm [shape: f32[2,16,16], index: 2, kind: output, shape index: {}]
  %s3 = sld [smem:[#allocation0]]
  $region57: #{tpu_custom_call.1} parent=0
    _
  %s5 = ssub.s32 1, %s3
  %s6 = scalar_select 0, %s5, %s3
  $region1: #{tpu_custom_call.1} parent=0
    #allocation5 [shape = 'u8[512]{0}', space=smem, size = 0x200, scoped, tag = 'input window, operand 0, single buffered']
    #allocation6 [shape = 's32[2]{0}', space=sflag, size = 0x8, scoped, tag = 'scoped memory for tpu_custom_call.1']
    #allocation7 [shape = 's32[2]{0}', space=sflag, size = 0x8, scoped, tag = 'scoped memory for tpu_custom_call.1']
    #allocation8 [shape = 's32[2]{0}', space=sflag, size = 0x8, scoped, tag = 'scoped memory for tpu_custom_call.1']
    #allocation9 [shape = 'u8[16384]{0}', space=vmem, size = 0x4000, scoped, tag = 'input window, operand 1']
    #allocation10 [shape = 'u8[16384]{0}', space=vmem, size = 0x4000, scoped, tag = 'output window, operand 0']
    %7 = vsyncpa [#allocation8], 0
    %8 = vsyncpa [#allocation6], 0
    %s9 = scalar_lea.sflag [#allocation6], 1
    %10 = vsyncpa %s9, 0
    %11 = vsyncpa [#allocation7], 0
    %s12 = scalar_lea.sflag [#allocation7], 1
    %13 = vsyncpa %s12, 0
    loop: start=0, step=1, limit=10
    $region2: #{tpu_custom_call.1} parent=1 // loop_pre_header
      _
    $region3: #{tpu_custom_call.1} parent=1 // loop_header
      %s15 = sphi 0, %s19
      %p16 = scmp.ge.s32.totalorder %s15, 10
      %s22 = sphi 0, %s34
      %s23 = sphi 0, %s30
      %s24 = sphi 0, %s22
      %s25 = sphi 0, %s23
      %s26 = sphi 0, %s24
      %s27 = sphi 0, %s25
      %s35 = sphi 0, %s35
      %s37 = sphi 0, %s35
      %s38 = sphi 0, %s37
      %s52 = sphi 0, %s38
      %s60 = sphi 0, %s62
      %s63 = sphi 0, %s60
      %s64 = sphi 0, %s63
      %s80 = sphi 0, %s64
      %s86 = sphi 0, %s88
      %s89 = sphi 0, %s86
      %s90 = sphi 0, %s89
      %s106 = sphi 0, %s90
    $region4: #{tpu_custom_call.1} parent=1 // loop_header_branch
      %18 = sbr.rel (%p16) target = $region8
    $region5: #{tpu_custom_call.1} parent=1 // loop_body
      %s20 = ssub.s32 %s15, 1
      %s21 = ssub.s32 %s15, 2
      %s28 = sadd.s32 1, %s23
      %p29 = scmp.ge.s32.totalorder %s28, 4
      %s30 = scalar_select %p29, 0, %s28
      %s31 = sadd.s32 1, %s22
      %s32 = scalar_select %p29, %s31, %s22
      %p33 = scmp.ge.s32.totalorder %s32, 2
      %s34 = scalar_select %p33, 0, %s32
      %s36 = sadd.s32 %s35, 1
      %p39 = scmp.eq.s32.totalorder %s15, 7
      %p40 = scmp.ne.s32.totalorder %s35, %s37
      %p41 = scmp.eq.s32.totalorder %s15, 0
      %p42 = por %p40, %p41
      %p43 = scmp.ne.s32.totalorder %s35, %s37
      %p44 = scmp.eq.s32.totalorder %s20, 7
      %p45 = por %p43, %p44
      %p46 = scmp.ne.s32.totalorder %s37, %s38
      %p47 = scmp.eq.s32.totalorder %s20, 0
      %p48 = por %p46, %p47
      %p49 = scmp.ne.s32.totalorder %s37, %s38
      %p50 = scmp.eq.s32.totalorder %s21, 7
      %p51 = por %p49, %p50
      %p53 = scmp.ne.s32.totalorder %s38, %s52
      %p54 = scmp.eq.s32.totalorder %s21, 0
      %p55 = por %p53, %p54
      %s56 = ssub.s32 %s22, %s34
      %s57 = ssub.s32 %s23, %s30
      %s58 = sor.u32 %s56, %s57
      %p59 = scmp.eq.s32.totalorder %s58, 0
      %s61 = sadd.s32 %s60, 1
      %s62 = scalar_select %p59, %s60, %s61
      %p65 = pneg %p59
      %p66 = scmp.eq.s32.totalorder %s15, 7
      %p67 = por %p65, %p66
      %p68 = scmp.ne.s32.totalorder %s60, %s63
      %p69 = scmp.eq.s32.totalorder %s15, 0
      %p70 = por %p68, %p69
      %p71 = scmp.ne.s32.totalorder %s60, %s63
      %p72 = scmp.eq.s32.totalorder %s20, 7
      %p73 = por %p71, %p72
      %p74 = scmp.ne.s32.totalorder %s63, %s64
      %p75 = scmp.eq.s32.totalorder %s20, 0
      %p76 = por %p74, %p75
      %p77 = scmp.ne.s32.totalorder %s63, %s64
      %p78 = scmp.eq.s32.totalorder %s21, 7
      %p79 = por %p77, %p78
      %p81 = scmp.ne.s32.totalorder %s64, %s80
      %p82 = scmp.eq.s32.totalorder %s21, 0
      %p83 = por %p81, %p82
      %s84 = ssub.s32 %s22, %s34
      %p85 = scmp.eq.s32.totalorder %s84, 0
      %s87 = sadd.s32 %s86, 1
      %s88 = scalar_select %p85, %s86, %s87
      %p91 = pneg %p85
      %p92 = scmp.eq.s32.totalorder %s15, 7
      %p93 = por %p91, %p92
      %p94 = scmp.ne.s32.totalorder %s86, %s89
      %p95 = scmp.eq.s32.totalorder %s15, 0
      %p96 = por %p94, %p95
      %p97 = scmp.ne.s32.totalorder %s86, %s89
      %p98 = scmp.eq.s32.totalorder %s20, 7
      %p99 = por %p97, %p98
      %p100 = scmp.ne.s32.totalorder %s89, %s90
      %p101 = scmp.eq.s32.totalorder %s20, 0
      %p102 = por %p100, %p101
      %p103 = scmp.ne.s32.totalorder %s89, %s90
      %p104 = scmp.eq.s32.totalorder %s21, 7
      %p105 = por %p103, %p104
      %p107 = scmp.ne.s32.totalorder %s90, %s106
      %p108 = scmp.eq.s32.totalorder %s21, 0
      %p109 = por %p107, %p108
      %p110 = scmp.le.s32.totalorder 1, %s15
      %p111 = scmp.lt.s32.totalorder %s15, 9
      %p112 = pnand %p110, %p111
      %p113 = pneg %p112
      // Predicated region
      $region9: #{tpu_custom_call.1} parent=5 // pred_check
        _
      $region10: #{tpu_custom_call.1} parent=5 // pred_check_branch
        %115 = sbr.rel (%p112) target = $region12
      $region11: #{tpu_custom_call.1} parent=5 // pred_region
        %s116 = ssub.s32 %s15, 1
        // Predicated region
        $region13: #{tpu_custom_call.1} parent=11 // pred_check
          %p117 = pneg %p48
        $region14: #{tpu_custom_call.1} parent=11 // pred_check_branch
          %119 = sbr.rel (%p117) target = $region16
        $region15: #{tpu_custom_call.1} parent=11 // pred_region
          %s121 = ssub.s32 16, 16
          %122 = vsyncadd [#allocation8], %s121
          %125 = dma.hbm_to_smem %s0, 16, [#allocation5], [#allocation8]
        $region16: #{tpu_custom_call.1} parent=11 // pred_fallthru
          _
      $region12: #{tpu_custom_call.1} parent=5 // pred_fallthru
        _
      %p126 = scmp.lt.s32.totalorder %s15, 8
      // Predicated region
      $region17: #{tpu_custom_call.1} parent=5 // pred_check
        %p127 = pneg %p126
      $region18: #{tpu_custom_call.1} parent=5 // pred_check_branch
        %129 = sbr.rel (%p127) target = $region20
      $region19: #{tpu_custom_call.1} parent=5 // pred_region
        // Predicated region
        $region21: #{tpu_custom_call.1} parent=19 // pred_check
          %p130 = pneg %p70
        $region22: #{tpu_custom_call.1} parent=19 // pred_check_branch
          %132 = sbr.rel (%p130) target = $region24
        $region23: #{tpu_custom_call.1} parent=19 // pred_region
          %s133 = sand.u32 %s60, 1
          %s134 = scalar_lea.sflag [#allocation6], %s133
          %s135 = sand.u32 %s60, 1
          %s136 = smul.addr %s135, 16
          %s137 = scalar_lea.vmem [#allocation9], %s136
          %s139 = ssub.s32 256, 256
          %140 = vsyncadd %s134, %s139
          %s141 = smul.addr %s23, 2
          %s142 = smul.addr %s22, 8
          %s143 = sadd.s32 %s141, %s142
          %s144 = smul.addr %s143, 128
          %s145 = scalar_lea.hbm %s1, %s144
          %s146 = sshll.u32 %s137, 4
          %s147 = int_to_ptr.vmem [resolvable:$true] %s146
          %152 = dma.hbm_to_vmem [thread:$0]  %s145, 256, %s147, %s134, 128, 128, 8
        $region24: #{tpu_custom_call.1} parent=19 // pred_fallthru
          _
      $region20: #{tpu_custom_call.1} parent=5 // pred_fallthru
        _
      %p153 = scmp.le.s32.totalorder 1, %s15
      %p154 = scmp.lt.s32.totalorder %s15, 9
      %p155 = pnand %p153, %p154
      %p156 = pneg %p155
      // Predicated region
      $region25: #{tpu_custom_call.1} parent=5 // pred_check
        _
      $region26: #{tpu_custom_call.1} parent=5 // pred_check_branch
        %158 = sbr.rel (%p155) target = $region28
      $region27: #{tpu_custom_call.1} parent=5 // pred_region
        %s159 = ssub.s32 %s15, 1
        // Predicated region
        $region29: #{tpu_custom_call.1} parent=27 // pred_check
          %p160 = pneg %p48
        $region30: #{tpu_custom_call.1} parent=27 // pred_check_branch
          %162 = sbr.rel (%p160) target = $region32
        $region31: #{tpu_custom_call.1} parent=27 // pred_region
          %163 = dma.done [#allocation8], 16
        $region32: #{tpu_custom_call.1} parent=27 // pred_fallthru
          _
        %s164 = sand.u32 %s63, 1
        %s165 = scalar_lea.sflag [#allocation6], %s164
        %s166 = sand.u32 %s63, 1
        %s167 = smul.addr %s166, 16
        %s168 = scalar_lea.vmem [#allocation9], %s167
        // Predicated region
        $region33: #{tpu_custom_call.1} parent=27 // pred_check
          %p169 = pneg %p76
        $region34: #{tpu_custom_call.1} parent=27 // pred_check_branch
          %171 = sbr.rel (%p169) target = $region36
        $region35: #{tpu_custom_call.1} parent=27 // pred_region
          %172 = dma.done %s165, 256
        $region36: #{tpu_custom_call.1} parent=27 // pred_fallthru
          _
        %173 = sfence
        %p174 = pneg %p48
        %p175 = pneg %p45
        %s176 = sand.u32 %s63, 1
        %s177 = scalar_lea.sflag [#allocation6], %s176
        %s178 = sand.u32 %s63, 1
        %s179 = smul.addr %s178, 16
        %s180 = scalar_lea.vmem [#allocation9], %s179
        %p181 = pneg %p76
        %p182 = pneg %p73
        %p183 = pneg %p102
        %p184 = pneg %p99
        %s185 = sand.u32 %s89, 1
        %s186 = scalar_lea.sflag [#allocation7], %s185
        %s187 = sand.u32 %s89, 1
        %s188 = smul.addr %s187, 16
        %s189 = scalar_lea.vmem [#allocation10], %s188
        %p190 = scmp.eq.s32.totalorder %s25, 0
        // Predicated region
        $region37: #{tpu_custom_call.1} parent=27 // pred_check
          %p191 = pneg %p190
        $region38: #{tpu_custom_call.1} parent=27 // pred_check_branch
          %193 = sbr.rel (%p191) target = $region40
        $region39: #{tpu_custom_call.1} parent=27 // pred_region
          %vm194 = vcmask 130048
          %195 = vst.msk [vmem:[#allocation2] sm:$0xff] %vm194, 0.0
          %196 = vst.msk [vmem:[#allocation2 + $0x8] sm:$0xff] %vm194, 0.0
          %197 = vst.msk [vmem:[#allocation3] sm:$0xff] %vm194, -inf
          %198 = vst.msk [vmem:[#allocation3 + $0x8] sm:$0xff] %vm194, -inf
        $region40: #{tpu_custom_call.1} parent=27 // pred_fallthru
          _
        %v199 = vld [vmem:[%s168] sm:$0xff]
        %v200 = vld [vmem:[%s168 + $0x8] sm:$0xff]
        %v201 = vld [vmem:[#allocation2] sm:$0xff]
        %v202 = vld [vmem:[#allocation2 + $0x8] sm:$0xff]
        %v203 = vadd.f32 %v199, 0.0
        %v204 = vadd.f32 %v200, 0.0
        %v205 = vadd.f32 %v201, %v203
        %v206 = vadd.f32 %v202, %v204
        %vm207 = vcmask 130048
        %208 = vst.msk [vmem:[#allocation2] sm:$0xff] %vm207, %v205
        %209 = vst.msk [vmem:[#allocation2 + $0x8] sm:$0xff] %vm207, %v206
        %v210 = vld [vmem:[#allocation3] sm:$0xff]
        %v211 = vld [vmem:[#allocation3 + $0x8] sm:$0xff]
        %v212 = vmax.f32 %v210, %v199
        %v213 = vmax.f32 %v211, %v200
        %214 = vst.msk [vmem:[#allocation3] sm:$0xff] %vm207, %v212
        %215 = vst.msk [vmem:[#allocation3 + $0x8] sm:$0xff] %vm207, %v213
        %p216 = scmp.eq.s32.totalorder %s25, 3
        // Predicated region
        $region41: #{tpu_custom_call.1} parent=27 // pred_check
          %p217 = pneg %p216
        $region42: #{tpu_custom_call.1} parent=27 // pred_check_branch
          %219 = sbr.rel (%p217) target = $region44
        $region43: #{tpu_custom_call.1} parent=27 // pred_region
          %s220 = sld [smem:[#allocation5]]
          %s221 = sld [smem:[#allocation5 + $0x1]]
          %s222 = sld [smem:[#allocation5 + $0x2]]
          %s223 = sld [smem:[#allocation5 + $0x3]]
          %s224 = sld [smem:[#allocation5 + $0x4]]
          %s225 = sld [smem:[#allocation5 + $0x5]]
          %s226 = sld [smem:[#allocation5 + $0x6]]
          %s227 = sld [smem:[#allocation5 + $0x7]]
          %s228 = sld [smem:[#allocation5 + $0x8]]
          %s229 = sld [smem:[#allocation5 + $0x9]]
          %s230 = sld [smem:[#allocation5 + $0xa]]
          %s231 = sld [smem:[#allocation5 + $0xb]]
          %s232 = sld [smem:[#allocation5 + $0xc]]
          %s233 = sld [smem:[#allocation5 + $0xd]]
          %s234 = sld [smem:[#allocation5 + $0xe]]
          %s235 = sld [smem:[#allocation5 + $0xf]]
          %s236 = sld [smem:[#allocation5 + $0x10]]
          %s237 = sld [smem:[#allocation5 + $0x11]]
          %s238 = sld [smem:[#allocation5 + $0x12]]
          %s239 = sld [smem:[#allocation5 + $0x13]]
          %s240 = sld [smem:[#allocation5 + $0x14]]
          %s241 = sld [smem:[#allocation5 + $0x15]]
          %s242 = sld [smem:[#allocation5 + $0x16]]
          %s243 = sld [smem:[#allocation5 + $0x17]]
          %s244 = sld [smem:[#allocation5 + $0x18]]
          %s245 = sld [smem:[#allocation5 + $0x19]]
          %s246 = sld [smem:[#allocation5 + $0x1a]]
          %s247 = sld [smem:[#allocation5 + $0x1b]]
          %s248 = sld [smem:[#allocation5 + $0x1c]]
          %s249 = sld [smem:[#allocation5 + $0x1d]]
          %s250 = sld [smem:[#allocation5 + $0x1e]]
          %s251 = sld [smem:[#allocation5 + $0x1f]]
          %s252 = sld [smem:[#allocation5 + $0x20]]
          %s253 = sld [smem:[#allocation5 + $0x21]]
          %s254 = sld [smem:[#allocation5 + $0x22]]
          %s255 = sld [smem:[#allocation5 + $0x23]]
          %s256 = sld [smem:[#allocation5 + $0x24]]
          %s257 = sld [smem:[#allocation5 + $0x25]]
          %s258 = sld [smem:[#allocation5 + $0x26]]
          %s259 = sld [smem:[#allocation5 + $0x27]]
          %s260 = sld [smem:[#allocation5 + $0x28]]
          %s261 = sld [smem:[#allocation5 + $0x29]]
          %s262 = sld [smem:[#allocation5 + $0x2a]]
          %s263 = sld [smem:[#allocation5 + $0x2b]]
          %s264 = sld [smem:[#allocation5 + $0x2c]]
          %s265 = sld [smem:[#allocation5 + $0x2d]]
          %s266 = sld [smem:[#allocation5 + $0x2e]]
          %s267 = sld [smem:[#allocation5 + $0x2f]]
          %s268 = sld [smem:[#allocation5 + $0x30]]
          %s269 = sld [smem:[#allocation5 + $0x31]]
          %s270 = sld [smem:[#allocation5 + $0x32]]
          %s271 = sld [smem:[#allocation5 + $0x33]]
          %s272 = sld [smem:[#allocation5 + $0x34]]
          %s273 = sld [smem:[#allocation5 + $0x35]]
          %s274 = sld [smem:[#allocation5 + $0x36]]
          %s275 = sld [smem:[#allocation5 + $0x37]]
          %s276 = sld [smem:[#allocation5 + $0x38]]
          %s277 = sld [smem:[#allocation5 + $0x39]]
          %s278 = sld [smem:[#allocation5 + $0x3a]]
          %s279 = sld [smem:[#allocation5 + $0x3b]]
          %s280 = sld [smem:[#allocation5 + $0x3c]]
          %s281 = sld [smem:[#allocation5 + $0x3d]]
          %s282 = sld [smem:[#allocation5 + $0x3e]]
          %s283 = sld [smem:[#allocation5 + $0x3f]]
          %s284 = sld [smem:[#allocation5 + $0x40]]
          %s285 = sld [smem:[#allocation5 + $0x41]]
          %s286 = sld [smem:[#allocation5 + $0x42]]
          %s287 = sld [smem:[#allocation5 + $0x43]]
          %s288 = sld [smem:[#allocation5 + $0x44]]
          %s289 = sld [smem:[#allocation5 + $0x45]]
          %s290 = sld [smem:[#allocation5 + $0x46]]
          %s291 = sld [smem:[#allocation5 + $0x47]]
          %s292 = sld [smem:[#allocation5 + $0x48]]
          %s293 = sld [smem:[#allocation5 + $0x49]]
          %s294 = sld [smem:[#allocation5 + $0x4a]]
          %s295 = sld [smem:[#allocation5 + $0x4b]]
          %s296 = sld [smem:[#allocation5 + $0x4c]]
          %s297 = sld [smem:[#allocation5 + $0x4d]]
          %s298 = sld [smem:[#allocation5 + $0x4e]]
          %s299 = sld [smem:[#allocation5 + $0x4f]]
          %s300 = sld [smem:[#allocation5 + $0x50]]
          %s301 = sld [smem:[#allocation5 + $0x51]]
          %s302 = sld [smem:[#allocation5 + $0x52]]
          %s303 = sld [smem:[#allocation5 + $0x53]]
          %s304 = sld [smem:[#allocation5 + $0x54]]
          %s305 = sld [smem:[#allocation5 + $0x55]]
          %s306 = sld [smem:[#allocation5 + $0x56]]
          %s307 = sld [smem:[#allocation5 + $0x57]]
          %s308 = sld [smem:[#allocation5 + $0x58]]
          %s309 = sld [smem:[#allocation5 + $0x59]]
          %s310 = sld [smem:[#allocation5 + $0x5a]]
          %s311 = sld [smem:[#allocation5 + $0x5b]]
          %s312 = sld [smem:[#allocation5 + $0x5c]]
          %s313 = sld [smem:[#allocation5 + $0x5d]]
          %s314 = sld [smem:[#allocation5 + $0x5e]]
          %s315 = sld [smem:[#allocation5 + $0x5f]]
          %s316 = sld [smem:[#allocation5 + $0x60]]
          %s317 = sld [smem:[#allocation5 + $0x61]]
          %vm318 = vcmask 174080
          %319 = vst.msk [vmem:[#allocation4] sm:$0x7] %vm318, 0.0
          %320 = vst.msk [vmem:[#allocation4 + $0x13] sm:$0x7] %vm318, 0.0
          %vm321 = vcmask 23552
          %322 = vst.msk [vmem:[#allocation4 + $0x3] sm:$0xff] %vm321, 0.0
          %323 = vst.msk [vmem:[#allocation4 + $0xb] sm:$0xff] %vm321, 0.0
          %vm324 = vcmask 179352
          %325 = vst.msk [vmem:[#allocation4 + $0x3] sm:$0xff] %vm324, 0.0
          %326 = vst.msk [vmem:[#allocation4 + $0xb] sm:$0xff] %vm324, 0.0
          %s327 = scalar_lea.vmem [#allocation4], 24
          %328 = vst.msk [vmem:[%s327] sm:$0x7] %vm318, 0.0
          %329 = vst.msk [vmem:[%s327 + $0x13] sm:$0x7] %vm318, 0.0
          %330 = vst.msk [vmem:[%s327 + $0x3] sm:$0xff] %vm321, 0.0
          %331 = vst.msk [vmem:[%s327 + $0xb] sm:$0xff] %vm321, 0.0
          %332 = vst.msk [vmem:[%s327 + $0x3] sm:$0xff] %vm324, 0.0
          %333 = vst.msk [vmem:[%s327 + $0xb] sm:$0xff] %vm324, 0.0
          %v334 = vld [vmem:[#allocation2] sm:$0xff]
          %v335 = vld [vmem:[#allocation2 + $0x8] sm:$0xff]
          %338 = vrot.lane.b32.xlu0 %v334, 3
          %v339 = vpop.permute.xlu0 %338
          %340 = vrot.lane.b32.xlu0 %v335, 3
          %v341 = vpop.permute.xlu0 %340
          %vm344 = vcmask 154648
          %345 = vst.msk [vmem:[#allocation4 + $0x3] sm:$0xff] %vm344, %v339
          %346 = vst.msk [vmem:[#allocation4 + $0xb] sm:$0xff] %vm344, %v341
          %v347 = vld [vmem:[#allocation3] sm:$0xff]
          %v348 = vld [vmem:[#allocation3 + $0x8] sm:$0xff]
          %351 = vrot.lane.b32.xlu0 %v347, 3
          %v352 = vpop.permute.xlu0 %351
          %353 = vrot.lane.b32.xlu0 %v348, 3
          %v354 = vpop.permute.xlu0 %353
          %357 = vst.msk [vmem:[%s327 + $0x3] sm:$0xff] %vm344, %v352
          %358 = vst.msk [vmem:[%s327 + $0xb] sm:$0xff] %vm344, %v354
          %v359 = vld [vmem:[#allocation4] sm:$0xff]
          %v360 = vld [vmem:[#allocation4 + $0x8] sm:$0xff]
          %v361 = vld [vmem:[#allocation4 + $0x10] sm:$0x3f]
          %v362 = vstv %s220
          %v363 = vmul.f32 %v359, %v362
          %v364 = vmul.f32 %v360, %v362
          %v365 = vstv %s221
          %v366 = vmul.f32 %v359, %v365
          %v367 = vmul.f32 %v360, %v365
          %370 = vrot.lane.b32.xlu0 %v366, 127
          %v371 = vpop.permute.xlu0 %370
          %372 = vrot.lane.b32.xlu0 %v367, 127
          %v373 = vpop.permute.xlu0 %372
          %v376 = vadd.f32 %v363, %v371
          %v377 = vadd.f32 %v364, %v373
          %v378 = vstv %s222
          %v379 = vmul.f32 %v359, %v378
          %v380 = vmul.f32 %v360, %v378
          %383 = vrot.lane.b32.xlu0 %v379, 126
          %v384 = vpop.permute.xlu0 %383
          %385 = vrot.lane.b32.xlu0 %v380, 126
          %v386 = vpop.permute.xlu0 %385
          %v389 = vadd.f32 %v376, %v384
          %v390 = vadd.f32 %v377, %v386
          %v391 = vstv %s223
          %v392 = vmul.f32 %v359, %v391
          %v393 = vmul.f32 %v360, %v391
          %396 = vrot.lane.b32.xlu0 %v392, 125
          %v397 = vpop.permute.xlu0 %396
          %398 = vrot.lane.b32.xlu0 %v393, 125
          %v399 = vpop.permute.xlu0 %398
          %v402 = vadd.f32 %v389, %v397
          %v403 = vadd.f32 %v390, %v399
          %v404 = vstv %s224
          %v405 = vmul.f32 %v359, %v404
          %v406 = vmul.f32 %v360, %v404
          %409 = vrot.lane.b32.xlu0 %v405, 124
          %v410 = vpop.permute.xlu0 %409
          %411 = vrot.lane.b32.xlu0 %v406, 124
          %v412 = vpop.permute.xlu0 %411
          %v415 = vadd.f32 %v402, %v410
          %v416 = vadd.f32 %v403, %v412
          %v417 = vstv %s225
          %v418 = vmul.f32 %v359, %v417
          %v419 = vmul.f32 %v360, %v417
          %422 = vrot.lane.b32.xlu0 %v418, 123
          %v423 = vpop.permute.xlu0 %422
          %424 = vrot.lane.b32.xlu0 %v419, 123
          %v425 = vpop.permute.xlu0 %424
          %v428 = vadd.f32 %v415, %v423
          %v429 = vadd.f32 %v416, %v425
          %v430 = vstv %s226
          %v431 = vmul.f32 %v359, %v430
          %v432 = vmul.f32 %v360, %v430
          %435 = vrot.lane.b32.xlu0 %v431, 122
          %v436 = vpop.permute.xlu0 %435
          %437 = vrot.lane.b32.xlu0 %v432, 122
          %v438 = vpop.permute.xlu0 %437
          %v441 = vadd.f32 %v428, %v436
          %v442 = vadd.f32 %v429, %v438
          %v443 = vadd.f32 %v441, 0.0
          %v444 = vadd.f32 %v442, 0.0
          %v445 = vstv %s227
          %v446 = vmul.f32 %v359, %v445
          %v447 = vmul.f32 %v360, %v445
          %v448 = vmul.f32 %v361, %v445
          %v449 = vstv %s228
          %v450 = vmul.f32 %v359, %v449
          %v451 = vmul.f32 %v360, %v449
          %v452 = vmul.f32 %v361, %v449
          %456 = vrot.lane.b32.xlu0 %v450, 127
          %v457 = vpop.permute.xlu0 %456
          %458 = vrot.lane.b32.xlu0 %v451, 127
          %v459 = vpop.permute.xlu0 %458
          %460 = vrot.lane.b32.xlu0 %v452, 127
          %v461 = vpop.permute.xlu0 %460
          %v465 = vadd.f32 %v446, %v457
          %v466 = vadd.f32 %v447, %v459
          %v467 = vadd.f32 %v448, %v461
          %v468 = vstv %s229
          %v469 = vmul.f32 %v359, %v468
          %v470 = vmul.f32 %v360, %v468
          %v471 = vmul.f32 %v361, %v468
          %475 = vrot.lane.b32.xlu0 %v469, 126
          %v476 = vpop.permute.xlu0 %475
          %477 = vrot.lane.b32.xlu0 %v470, 126
          %v478 = vpop.permute.xlu0 %477
          %479 = vrot.lane.b32.xlu0 %v471, 126
          %v480 = vpop.permute.xlu0 %479
          %v484 = vadd.f32 %v465, %v476
          %v485 = vadd.f32 %v466, %v478
          %v486 = vadd.f32 %v467, %v480
          %v487 = vstv %s230
          %v488 = vmul.f32 %v359, %v487
          %v489 = vmul.f32 %v360, %v487
          %v490 = vmul.f32 %v361, %v487
          %494 = vrot.lane.b32.xlu0 %v488, 125
          %v495 = vpop.permute.xlu0 %494
          %496 = vrot.lane.b32.xlu0 %v489, 125
          %v497 = vpop.permute.xlu0 %496
          %498 = vrot.lane.b32.xlu0 %v490, 125
          %v499 = vpop.permute.xlu0 %498
          %v503 = vadd.f32 %v484, %v495
          %v504 = vadd.f32 %v485, %v497
          %v505 = vadd.f32 %v486, %v499
          %v506 = vstv %s231
          %v507 = vmul.f32 %v359, %v506
          %v508 = vmul.f32 %v360, %v506
          %v509 = vmul.f32 %v361, %v506
          %513 = vrot.lane.b32.xlu0 %v507, 124
          %v514 = vpop.permute.xlu0 %513
          %515 = vrot.lane.b32.xlu0 %v508, 124
          %v516 = vpop.permute.xlu0 %515
          %517 = vrot.lane.b32.xlu0 %v509, 124
          %v518 = vpop.permute.xlu0 %517
          %v522 = vadd.f32 %v503, %v514
          %v523 = vadd.f32 %v504, %v516
          %v524 = vadd.f32 %v505, %v518
          %v525 = vstv %s232
          %v526 = vmul.f32 %v359, %v525
          %v527 = vmul.f32 %v360, %v525
          %v528 = vmul.f32 %v361, %v525
          %532 = vrot.lane.b32.xlu0 %v526, 123
          %v533 = vpop.permute.xlu0 %532
          %534 = vrot.lane.b32.xlu0 %v527, 123
          %v535 = vpop.permute.xlu0 %534
          %536 = vrot.lane.b32.xlu0 %v528, 123
          %v537 = vpop.permute.xlu0 %536
          %v541 = vadd.f32 %v522, %v533
          %v542 = vadd.f32 %v523, %v535
          %v543 = vadd.f32 %v524, %v537
          %v544 = vstv %s233
          %v545 = vmul.f32 %v359, %v544
          %v546 = vmul.f32 %v360, %v544
          %v547 = vmul.f32 %v361, %v544
          %551 = vrot.lane.b32.xlu0 %v545, 122
          %v552 = vpop.permute.xlu0 %551
          %553 = vrot.lane.b32.xlu0 %v546, 122
          %v554 = vpop.permute.xlu0 %553
          %555 = vrot.lane.b32.xlu0 %v547, 122
          %v556 = vpop.permute.xlu0 %555
          %v560 = vadd.f32 %v541, %v552
          %v561 = vadd.f32 %v542, %v554
          %v562 = vadd.f32 %v543, %v556
          %vm566 = vcmask 1046528
          %v567 = vrot.slane %v560, 1
          %v568 = vrot.slane %v561, 1
          %v569 = vsel %vm566, %v567, %v568
          %v570 = vrot.slane %v562, 1
          %v571 = vsel %vm566, %v568, %v570
          %v574 = vadd.f32 %v443, %v569
          %v575 = vadd.f32 %v444, %v571
          %v576 = vstv %s234
          %v577 = vmul.f32 %v359, %v576
          %v578 = vmul.f32 %v360, %v576
          %v579 = vmul.f32 %v361, %v576
          %v580 = vstv %s235
          %v581 = vmul.f32 %v359, %v580
          %v582 = vmul.f32 %v360, %v580
          %v583 = vmul.f32 %v361, %v580
          %587 = vrot.lane.b32.xlu0 %v581, 127
          %v588 = vpop.permute.xlu0 %587
          %589 = vrot.lane.b32.xlu0 %v582, 127
          %v590 = vpop.permute.xlu0 %589
          %591 = vrot.lane.b32.xlu0 %v583, 127
          %v592 = vpop.permute.xlu0 %591
          %v596 = vadd.f32 %v577, %v588
          %v597 = vadd.f32 %v578, %v590
          %v598 = vadd.f32 %v579, %v592
          %v599 = vstv %s236
          %v600 = vmul.f32 %v359, %v599
          %v601 = vmul.f32 %v360, %v599
          %v602 = vmul.f32 %v361, %v599
          %606 = vrot.lane.b32.xlu0 %v600, 126
          %v607 = vpop.permute.xlu0 %606
          %608 = vrot.lane.b32.xlu0 %v601, 126
          %v609 = vpop.permute.xlu0 %608
          %610 = vrot.lane.b32.xlu0 %v602, 126
          %v611 = vpop.permute.xlu0 %610
          %v615 = vadd.f32 %v596, %v607
          %v616 = vadd.f32 %v597, %v609
          %v617 = vadd.f32 %v598, %v611
          %v618 = vstv %s237
          %v619 = vmul.f32 %v359, %v618
          %v620 = vmul.f32 %v360, %v618
          %v621 = vmul.f32 %v361, %v618
          %625 = vrot.lane.b32.xlu0 %v619, 125
          %v626 = vpop.permute.xlu0 %625
          %627 = vrot.lane.b32.xlu0 %v620, 125
          %v628 = vpop.permute.xlu0 %627
          %629 = vrot.lane.b32.xlu0 %v621, 125
          %v630 = vpop.permute.xlu0 %629
          %v634 = vadd.f32 %v615, %v626
          %v635 = vadd.f32 %v616, %v628
          %v636 = vadd.f32 %v617, %v630
          %v637 = vstv %s238
          %v638 = vmul.f32 %v359, %v637
          %v639 = vmul.f32 %v360, %v637
          %v640 = vmul.f32 %v361, %v637
          %644 = vrot.lane.b32.xlu0 %v638, 124
          %v645 = vpop.permute.xlu0 %644
          %646 = vrot.lane.b32.xlu0 %v639, 124
          %v647 = vpop.permute.xlu0 %646
          %648 = vrot.lane.b32.xlu0 %v640, 124
          %v649 = vpop.permute.xlu0 %648
          %v653 = vadd.f32 %v634, %v645
          %v654 = vadd.f32 %v635, %v647
          %v655 = vadd.f32 %v636, %v649
          %v656 = vstv %s239
          %v657 = vmul.f32 %v359, %v656
          %v658 = vmul.f32 %v360, %v656
          %v659 = vmul.f32 %v361, %v656
          %663 = vrot.lane.b32.xlu0 %v657, 123
          %v664 = vpop.permute.xlu0 %663
          %665 = vrot.lane.b32.xlu0 %v658, 123
          %v666 = vpop.permute.xlu0 %665
          %667 = vrot.lane.b32.xlu0 %v659, 123
          %v668 = vpop.permute.xlu0 %667
          %v672 = vadd.f32 %v653, %v664
          %v673 = vadd.f32 %v654, %v666
          %v674 = vadd.f32 %v655, %v668
          %v675 = vstv %s240
          %v676 = vmul.f32 %v359, %v675
          %v677 = vmul.f32 %v360, %v675
          %v678 = vmul.f32 %v361, %v675
          %682 = vrot.lane.b32.xlu0 %v676, 122
          %v683 = vpop.permute.xlu0 %682
          %684 = vrot.lane.b32.xlu0 %v677, 122
          %v685 = vpop.permute.xlu0 %684
          %686 = vrot.lane.b32.xlu0 %v678, 122
          %v687 = vpop.permute.xlu0 %686
          %v691 = vadd.f32 %v672, %v683
          %v692 = vadd.f32 %v673, %v685
          %v693 = vadd.f32 %v674, %v687
          %vm697 = vcmask 1045504
          %v698 = vrot.slane %v691, 2
          %v699 = vrot.slane %v692, 2
          %v700 = vsel %vm697, %v698, %v699
          %v701 = vrot.slane %v693, 2
          %v702 = vsel %vm697, %v699, %v701
          %v705 = vadd.f32 %v574, %v700
          %v706 = vadd.f32 %v575, %v702
          %v707 = vstv %s241
          %v708 = vmul.f32 %v359, %v707
          %v709 = vmul.f32 %v360, %v707
          %v710 = vmul.f32 %v361, %v707
          %v711 = vstv %s242
          %v712 = vmul.f32 %v359, %v711
          %v713 = vmul.f32 %v360, %v711
          %v714 = vmul.f32 %v361, %v711
          %718 = vrot.lane.b32.xlu0 %v712, 127
          %v719 = vpop.permute.xlu0 %718
          %720 = vrot.lane.b32.xlu0 %v713, 127
          %v721 = vpop.permute.xlu0 %720
          %722 = vrot.lane.b32.xlu0 %v714, 127
          %v723 = vpop.permute.xlu0 %722
          %v727 = vadd.f32 %v708, %v719
          %v728 = vadd.f32 %v709, %v721
          %v729 = vadd.f32 %v710, %v723
          %v730 = vstv %s243
          %v731 = vmul.f32 %v359, %v730
          %v732 = vmul.f32 %v360, %v730
          %v733 = vmul.f32 %v361, %v730
          %737 = vrot.lane.b32.xlu0 %v731, 126
          %v738 = vpop.permute.xlu0 %737
          %739 = vrot.lane.b32.xlu0 %v732, 126
          %v740 = vpop.permute.xlu0 %739
          %741 = vrot.lane.b32.xlu0 %v733, 126
          %v742 = vpop.permute.xlu0 %741
          %v746 = vadd.f32 %v727, %v738
          %v747 = vadd.f32 %v728, %v740
          %v748 = vadd.f32 %v729, %v742
          %v749 = vstv %s244
          %v750 = vmul.f32 %v359, %v749
          %v751 = vmul.f32 %v360, %v749
          %v752 = vmul.f32 %v361, %v749
          %756 = vrot.lane.b32.xlu0 %v750, 125
          %v757 = vpop.permute.xlu0 %756
          %758 = vrot.lane.b32.xlu0 %v751, 125
          %v759 = vpop.permute.xlu0 %758
          %760 = vrot.lane.b32.xlu0 %v752, 125
          %v761 = vpop.permute.xlu0 %760
          %v765 = vadd.f32 %v746, %v757
          %v766 = vadd.f32 %v747, %v759
          %v767 = vadd.f32 %v748, %v761
          %v768 = vstv %s245
          %v769 = vmul.f32 %v359, %v768
          %v770 = vmul.f32 %v360, %v768
          %v771 = vmul.f32 %v361, %v768
          %775 = vrot.lane.b32.xlu0 %v769, 124
          %v776 = vpop.permute.xlu0 %775
          %777 = vrot.lane.b32.xlu0 %v770, 124
          %v778 = vpop.permute.xlu0 %777
          %779 = vrot.lane.b32.xlu0 %v771, 124
          %v780 = vpop.permute.xlu0 %779
          %v784 = vadd.f32 %v765, %v776
          %v785 = vadd.f32 %v766, %v778
          %v786 = vadd.f32 %v767, %v780
          %v787 = vstv %s246
          %v788 = vmul.f32 %v359, %v787
          %v789 = vmul.f32 %v360, %v787
          %v790 = vmul.f32 %v361, %v787
          %794 = vrot.lane.b32.xlu0 %v788, 123
          %v795 = vpop.permute.xlu0 %794
          %796 = vrot.lane.b32.xlu0 %v789, 123
          %v797 = vpop.permute.xlu0 %796
          %798 = vrot.lane.b32.xlu0 %v790, 123
          %v799 = vpop.permute.xlu0 %798
          %v803 = vadd.f32 %v784, %v795
          %v804 = vadd.f32 %v785, %v797
          %v805 = vadd.f32 %v786, %v799
          %v806 = vstv %s247
          %v807 = vmul.f32 %v359, %v806
          %v808 = vmul.f32 %v360, %v806
          %v809 = vmul.f32 %v361, %v806
          %813 = vrot.lane.b32.xlu0 %v807, 122
          %v814 = vpop.permute.xlu0 %813
          %815 = vrot.lane.b32.xlu0 %v808, 122
          %v816 = vpop.permute.xlu0 %815
          %817 = vrot.lane.b32.xlu0 %v809, 122
          %v818 = vpop.permute.xlu0 %817
          %v822 = vadd.f32 %v803, %v814
          %v823 = vadd.f32 %v804, %v816
          %v824 = vadd.f32 %v805, %v818
          %vm828 = vcmask 1044480
          %v829 = vrot.slane %v822, 3
          %v830 = vrot.slane %v823, 3
          %v831 = vsel %vm828, %v829, %v830
          %v832 = vrot.slane %v824, 3
          %v833 = vsel %vm828, %v830, %v832
          %v836 = vadd.f32 %v705, %v831
          %v837 = vadd.f32 %v706, %v833
          %v838 = vstv %s248
          %v839 = vmul.f32 %v359, %v838
          %v840 = vmul.f32 %v360, %v838
          %v841 = vmul.f32 %v361, %v838
          %v842 = vstv %s249
          %v843 = vmul.f32 %v359, %v842
          %v844 = vmul.f32 %v360, %v842
          %v845 = vmul.f32 %v361, %v842
          %849 = vrot.lane.b32.xlu0 %v843, 127
          %v850 = vpop.permute.xlu0 %849
          %851 = vrot.lane.b32.xlu0 %v844, 127
          %v852 = vpop.permute.xlu0 %851
          %853 = vrot.lane.b32.xlu0 %v845, 127
          %v854 = vpop.permute.xlu0 %853
          %v858 = vadd.f32 %v839, %v850
          %v859 = vadd.f32 %v840, %v852
          %v860 = vadd.f32 %v841, %v854
          %v861 = vstv %s250
          %v862 = vmul.f32 %v359, %v861
          %v863 = vmul.f32 %v360, %v861
          %v864 = vmul.f32 %v361, %v861
          %868 = vrot.lane.b32.xlu0 %v862, 126
          %v869 = vpop.permute.xlu0 %868
          %870 = vrot.lane.b32.xlu0 %v863, 126
          %v871 = vpop.permute.xlu0 %870
          %872 = vrot.lane.b32.xlu0 %v864, 126
          %v873 = vpop.permute.xlu0 %872
          %v877 = vadd.f32 %v858, %v869
          %v878 = vadd.f32 %v859, %v871
          %v879 = vadd.f32 %v860, %v873
          %v880 = vstv %s251
          %v881 = vmul.f32 %v359, %v880
          %v882 = vmul.f32 %v360, %v880
          %v883 = vmul.f32 %v361, %v880
          %887 = vrot.lane.b32.xlu0 %v881, 125
          %v888 = vpop.permute.xlu0 %887
          %889 = vrot.lane.b32.xlu0 %v882, 125
          %v890 = vpop.permute.xlu0 %889
          %891 = vrot.lane.b32.xlu0 %v883, 125
          %v892 = vpop.permute.xlu0 %891
          %v896 = vadd.f32 %v877, %v888
          %v897 = vadd.f32 %v878, %v890
          %v898 = vadd.f32 %v879, %v892
          %v899 = vstv %s252
          %v900 = vmul.f32 %v359, %v899
          %v901 = vmul.f32 %v360, %v899
          %v902 = vmul.f32 %v361, %v899
          %906 = vrot.lane.b32.xlu0 %v900, 124
          %v907 = vpop.permute.xlu0 %906
          %908 = vrot.lane.b32.xlu0 %v901, 124
          %v909 = vpop.permute.xlu0 %908
          %910 = vrot.lane.b32.xlu0 %v902, 124
          %v911 = vpop.permute.xlu0 %910
          %v915 = vadd.f32 %v896, %v907
          %v916 = vadd.f32 %v897, %v909
          %v917 = vadd.f32 %v898, %v911
          %v918 = vstv %s253
          %v919 = vmul.f32 %v359, %v918
          %v920 = vmul.f32 %v360, %v918
          %v921 = vmul.f32 %v361, %v918
          %925 = vrot.lane.b32.xlu0 %v919, 123
          %v926 = vpop.permute.xlu0 %925
          %927 = vrot.lane.b32.xlu0 %v920, 123
          %v928 = vpop.permute.xlu0 %927
          %929 = vrot.lane.b32.xlu0 %v921, 123
          %v930 = vpop.permute.xlu0 %929
          %v934 = vadd.f32 %v915, %v926
          %v935 = vadd.f32 %v916, %v928
          %v936 = vadd.f32 %v917, %v930
          %v937 = vstv %s254
          %v938 = vmul.f32 %v359, %v937
          %v939 = vmul.f32 %v360, %v937
          %v940 = vmul.f32 %v361, %v937
          %944 = vrot.lane.b32.xlu0 %v938, 122
          %v945 = vpop.permute.xlu0 %944
          %946 = vrot.lane.b32.xlu0 %v939, 122
          %v947 = vpop.permute.xlu0 %946
          %948 = vrot.lane.b32.xlu0 %v940, 122
          %v949 = vpop.permute.xlu0 %948
          %v953 = vadd.f32 %v934, %v945
          %v954 = vadd.f32 %v935, %v947
          %v955 = vadd.f32 %v936, %v949
          %vm959 = vcmask 1043456
          %v960 = vrot.slane %v953, 4
          %v961 = vrot.slane %v954, 4
          %v962 = vsel %vm959, %v960, %v961
          %v963 = vrot.slane %v955, 4
          %v964 = vsel %vm959, %v961, %v963
          %v967 = vadd.f32 %v836, %v962
          %v968 = vadd.f32 %v837, %v964
          %v969 = vstv %s255
          %v970 = vmul.f32 %v359, %v969
          %v971 = vmul.f32 %v360, %v969
          %v972 = vmul.f32 %v361, %v969
          %v973 = vstv %s256
          %v974 = vmul.f32 %v359, %v973
          %v975 = vmul.f32 %v360, %v973
          %v976 = vmul.f32 %v361, %v973
          %980 = vrot.lane.b32.xlu0 %v974, 127
          %v981 = vpop.permute.xlu0 %980
          %982 = vrot.lane.b32.xlu0 %v975, 127
          %v983 = vpop.permute.xlu0 %982
          %984 = vrot.lane.b32.xlu0 %v976, 127
          %v985 = vpop.permute.xlu0 %984
          %v989 = vadd.f32 %v970, %v981
          %v990 = vadd.f32 %v971, %v983
          %v991 = vadd.f32 %v972, %v985
          %v992 = vstv %s257
          %v993 = vmul.f32 %v359, %v992
          %v994 = vmul.f32 %v360, %v992
          %v995 = vmul.f32 %v361, %v992
          %999 = vrot.lane.b32.xlu0 %v993, 126
          %v1000 = vpop.permute.xlu0 %999
          %1001 = vrot.lane.b32.xlu0 %v994, 126
          %v1002 = vpop.permute.xlu0 %1001
          %1003 = vrot.lane.b32.xlu0 %v995, 126
          %v1004 = vpop.permute.xlu0 %1003
          %v1008 = vadd.f32 %v989, %v1000
          %v1009 = vadd.f32 %v990, %v1002
          %v1010 = vadd.f32 %v991, %v1004
          %v1011 = vstv %s258
          %v1012 = vmul.f32 %v359, %v1011
          %v1013 = vmul.f32 %v360, %v1011
          %v1014 = vmul.f32 %v361, %v1011
          %1018 = vrot.lane.b32.xlu0 %v1012, 125
          %v1019 = vpop.permute.xlu0 %1018
          %1020 = vrot.lane.b32.xlu0 %v1013, 125
          %v1021 = vpop.permute.xlu0 %1020
          %1022 = vrot.lane.b32.xlu0 %v1014, 125
          %v1023 = vpop.permute.xlu0 %1022
          %v1027 = vadd.f32 %v1008, %v1019
          %v1028 = vadd.f32 %v1009, %v1021
          %v1029 = vadd.f32 %v1010, %v1023
          %v1030 = vstv %s259
          %v1031 = vmul.f32 %v359, %v1030
          %v1032 = vmul.f32 %v360, %v1030
          %v1033 = vmul.f32 %v361, %v1030
          %1037 = vrot.lane.b32.xlu0 %v1031, 124
          %v1038 = vpop.permute.xlu0 %1037
          %1039 = vrot.lane.b32.xlu0 %v1032, 124
          %v1040 = vpop.permute.xlu0 %1039
          %1041 = vrot.lane.b32.xlu0 %v1033, 124
          %v1042 = vpop.permute.xlu0 %1041
          %v1046 = vadd.f32 %v1027, %v1038
          %v1047 = vadd.f32 %v1028, %v1040
          %v1048 = vadd.f32 %v1029, %v1042
          %v1049 = vstv %s260
          %v1050 = vmul.f32 %v359, %v1049
          %v1051 = vmul.f32 %v360, %v1049
          %v1052 = vmul.f32 %v361, %v1049
          %1056 = vrot.lane.b32.xlu0 %v1050, 123
          %v1057 = vpop.permute.xlu0 %1056
          %1058 = vrot.lane.b32.xlu0 %v1051, 123
          %v1059 = vpop.permute.xlu0 %1058
          %1060 = vrot.lane.b32.xlu0 %v1052, 123
          %v1061 = vpop.permute.xlu0 %1060
          %v1065 = vadd.f32 %v1046, %v1057
          %v1066 = vadd.f32 %v1047, %v1059
          %v1067 = vadd.f32 %v1048, %v1061
          %v1068 = vstv %s261
          %v1069 = vmul.f32 %v359, %v1068
          %v1070 = vmul.f32 %v360, %v1068
          %v1071 = vmul.f32 %v361, %v1068
          %1075 = vrot.lane.b32.xlu0 %v1069, 122
          %v1076 = vpop.permute.xlu0 %1075
          %1077 = vrot.lane.b32.xlu0 %v1070, 122
          %v1078 = vpop.permute.xlu0 %1077
          %1079 = vrot.lane.b32.xlu0 %v1071, 122
          %v1080 = vpop.permute.xlu0 %1079
          %v1084 = vadd.f32 %v1065, %v1076
          %v1085 = vadd.f32 %v1066, %v1078
          %v1086 = vadd.f32 %v1067, %v1080
          %vm1090 = vcmask 1042432
          %v1091 = vrot.slane %v1084, 5
          %v1092 = vrot.slane %v1085, 5
          %v1093 = vsel %vm1090, %v1091, %v1092
          %v1094 = vrot.slane %v1086, 5
          %v1095 = vsel %vm1090, %v1092, %v1094
          %v1098 = vadd.f32 %v967, %v1093
          %v1099 = vadd.f32 %v968, %v1095
          %v1100 = vstv %s262
          %v1101 = vmul.f32 %v359, %v1100
          %v1102 = vmul.f32 %v360, %v1100
          %v1103 = vmul.f32 %v361, %v1100
          %v1104 = vstv %s263
          %v1105 = vmul.f32 %v359, %v1104
          %v1106 = vmul.f32 %v360, %v1104
          %v1107 = vmul.f32 %v361, %v1104
          %1111 = vrot.lane.b32.xlu0 %v1105, 127
          %v1112 = vpop.permute.xlu0 %1111
          %1113 = vrot.lane.b32.xlu0 %v1106, 127
          %v1114 = vpop.permute.xlu0 %1113
          %1115 = vrot.lane.b32.xlu0 %v1107, 127
          %v1116 = vpop.permute.xlu0 %1115
          %v1120 = vadd.f32 %v1101, %v1112
          %v1121 = vadd.f32 %v1102, %v1114
          %v1122 = vadd.f32 %v1103, %v1116
          %v1123 = vstv %s264
          %v1124 = vmul.f32 %v359, %v1123
          %v1125 = vmul.f32 %v360, %v1123
          %v1126 = vmul.f32 %v361, %v1123
          %1130 = vrot.lane.b32.xlu0 %v1124, 126
          %v1131 = vpop.permute.xlu0 %1130
          %1132 = vrot.lane.b32.xlu0 %v1125, 126
          %v1133 = vpop.permute.xlu0 %1132
          %1134 = vrot.lane.b32.xlu0 %v1126, 126
          %v1135 = vpop.permute.xlu0 %1134
          %v1139 = vadd.f32 %v1120, %v1131
          %v1140 = vadd.f32 %v1121, %v1133
          %v1141 = vadd.f32 %v1122, %v1135
          %v1142 = vstv %s265
          %v1143 = vmul.f32 %v359, %v1142
          %v1144 = vmul.f32 %v360, %v1142
          %v1145 = vmul.f32 %v361, %v1142
          %1149 = vrot.lane.b32.xlu0 %v1143, 125
          %v1150 = vpop.permute.xlu0 %1149
          %1151 = vrot.lane.b32.xlu0 %v1144, 125
          %v1152 = vpop.permute.xlu0 %1151
          %1153 = vrot.lane.b32.xlu0 %v1145, 125
          %v1154 = vpop.permute.xlu0 %1153
          %v1158 = vadd.f32 %v1139, %v1150
          %v1159 = vadd.f32 %v1140, %v1152
          %v1160 = vadd.f32 %v1141, %v1154
          %v1161 = vstv %s266
          %v1162 = vmul.f32 %v359, %v1161
          %v1163 = vmul.f32 %v360, %v1161
          %v1164 = vmul.f32 %v361, %v1161
          %1168 = vrot.lane.b32.xlu0 %v1162, 124
          %v1169 = vpop.permute.xlu0 %1168
          %1170 = vrot.lane.b32.xlu0 %v1163, 124
          %v1171 = vpop.permute.xlu0 %1170
          %1172 = vrot.lane.b32.xlu0 %v1164, 124
          %v1173 = vpop.permute.xlu0 %1172
          %v1177 = vadd.f32 %v1158, %v1169
          %v1178 = vadd.f32 %v1159, %v1171
          %v1179 = vadd.f32 %v1160, %v1173
          %v1180 = vstv %s267
          %v1181 = vmul.f32 %v359, %v1180
          %v1182 = vmul.f32 %v360, %v1180
          %v1183 = vmul.f32 %v361, %v1180
          %1187 = vrot.lane.b32.xlu0 %v1181, 123
          %v1188 = vpop.permute.xlu0 %1187
          %1189 = vrot.lane.b32.xlu0 %v1182, 123
          %v1190 = vpop.permute.xlu0 %1189
          %1191 = vrot.lane.b32.xlu0 %v1183, 123
          %v1192 = vpop.permute.xlu0 %1191
          %v1196 = vadd.f32 %v1177, %v1188
          %v1197 = vadd.f32 %v1178, %v1190
          %v1198 = vadd.f32 %v1179, %v1192
          %v1199 = vstv %s268
          %v1200 = vmul.f32 %v359, %v1199
          %v1201 = vmul.f32 %v360, %v1199
          %v1202 = vmul.f32 %v361, %v1199
          %1206 = vrot.lane.b32.xlu0 %v1200, 122
          %v1207 = vpop.permute.xlu0 %1206
          %1208 = vrot.lane.b32.xlu0 %v1201, 122
          %v1209 = vpop.permute.xlu0 %1208
          %1210 = vrot.lane.b32.xlu0 %v1202, 122
          %v1211 = vpop.permute.xlu0 %1210
          %v1215 = vadd.f32 %v1196, %v1207
          %v1216 = vadd.f32 %v1197, %v1209
          %v1217 = vadd.f32 %v1198, %v1211
          %vm1221 = vcmask 1041408
          %v1222 = vrot.slane %v1215, 6
          %v1223 = vrot.slane %v1216, 6
          %v1224 = vsel %vm1221, %v1222, %v1223
          %v1225 = vrot.slane %v1217, 6
          %v1226 = vsel %vm1221, %v1223, %v1225
          %v1229 = vadd.f32 %v1098, %v1224
          %v1230 = vadd.f32 %v1099, %v1226
          %v1231 = vld [vmem:[%s327] sm:$0xff]
          %v1232 = vld [vmem:[%s327 + $0x8] sm:$0xff]
          %v1233 = vld [vmem:[%s327 + $0x10] sm:$0x3f]
          %v1234 = vstv %s269
          %v1235 = vmul.f32 %v1231, %v1234
          %v1236 = vmul.f32 %v1232, %v1234
          %v1237 = vstv %s270
          %v1238 = vmul.f32 %v1231, %v1237
          %v1239 = vmul.f32 %v1232, %v1237
          %1242 = vrot.lane.b32.xlu0 %v1238, 127
          %v1243 = vpop.permute.xlu0 %1242
          %1244 = vrot.lane.b32.xlu0 %v1239, 127
          %v1245 = vpop.permute.xlu0 %1244
          %v1248 = vadd.f32 %v1235, %v1243
          %v1249 = vadd.f32 %v1236, %v1245
          %v1250 = vstv %s271
          %v1251 = vmul.f32 %v1231, %v1250
          %v1252 = vmul.f32 %v1232, %v1250
          %1255 = vrot.lane.b32.xlu0 %v1251, 126
          %v1256 = vpop.permute.xlu0 %1255
          %1257 = vrot.lane.b32.xlu0 %v1252, 126
          %v1258 = vpop.permute.xlu0 %1257
          %v1261 = vadd.f32 %v1248, %v1256
          %v1262 = vadd.f32 %v1249, %v1258
          %v1263 = vstv %s272
          %v1264 = vmul.f32 %v1231, %v1263
          %v1265 = vmul.f32 %v1232, %v1263
          %1268 = vrot.lane.b32.xlu0 %v1264, 125
          %v1269 = vpop.permute.xlu0 %1268
          %1270 = vrot.lane.b32.xlu0 %v1265, 125
          %v1271 = vpop.permute.xlu0 %1270
          %v1274 = vadd.f32 %v1261, %v1269
          %v1275 = vadd.f32 %v1262, %v1271
          %v1276 = vstv %s273
          %v1277 = vmul.f32 %v1231, %v1276
          %v1278 = vmul.f32 %v1232, %v1276
          %1281 = vrot.lane.b32.xlu0 %v1277, 124
          %v1282 = vpop.permute.xlu0 %1281
          %1283 = vrot.lane.b32.xlu0 %v1278, 124
          %v1284 = vpop.permute.xlu0 %1283
          %v1287 = vadd.f32 %v1274, %v1282
          %v1288 = vadd.f32 %v1275, %v1284
          %v1289 = vstv %s274
          %v1290 = vmul.f32 %v1231, %v1289
          %v1291 = vmul.f32 %v1232, %v1289
          %1294 = vrot.lane.b32.xlu0 %v1290, 123
          %v1295 = vpop.permute.xlu0 %1294
          %1296 = vrot.lane.b32.xlu0 %v1291, 123
          %v1297 = vpop.permute.xlu0 %1296
          %v1300 = vadd.f32 %v1287, %v1295
          %v1301 = vadd.f32 %v1288, %v1297
          %v1302 = vstv %s275
          %v1303 = vmul.f32 %v1231, %v1302
          %v1304 = vmul.f32 %v1232, %v1302
          %1307 = vrot.lane.b32.xlu0 %v1303, 122
          %v1308 = vpop.permute.xlu0 %1307
          %1309 = vrot.lane.b32.xlu0 %v1304, 122
          %v1310 = vpop.permute.xlu0 %1309
          %v1313 = vadd.f32 %v1300, %v1308
          %v1314 = vadd.f32 %v1301, %v1310
          %v1315 = vadd.f32 %v1229, %v1313
          %v1316 = vadd.f32 %v1230, %v1314
          %v1317 = vstv %s276
          %v1318 = vmul.f32 %v1231, %v1317
          %v1319 = vmul.f32 %v1232, %v1317
          %v1320 = vmul.f32 %v1233, %v1317
          %v1321 = vstv %s277
          %v1322 = vmul.f32 %v1231, %v1321
          %v1323 = vmul.f32 %v1232, %v1321
          %v1324 = vmul.f32 %v1233, %v1321
          %1328 = vrot.lane.b32.xlu0 %v1322, 127
          %v1329 = vpop.permute.xlu0 %1328
          %1330 = vrot.lane.b32.xlu0 %v1323, 127
          %v1331 = vpop.permute.xlu0 %1330
          %1332 = vrot.lane.b32.xlu0 %v1324, 127
          %v1333 = vpop.permute.xlu0 %1332
          %v1337 = vadd.f32 %v1318, %v1329
          %v1338 = vadd.f32 %v1319, %v1331
          %v1339 = vadd.f32 %v1320, %v1333
          %v1340 = vstv %s278
          %v1341 = vmul.f32 %v1231, %v1340
          %v1342 = vmul.f32 %v1232, %v1340
          %v1343 = vmul.f32 %v1233, %v1340
          %1347 = vrot.lane.b32.xlu0 %v1341, 126
          %v1348 = vpop.permute.xlu0 %1347
          %1349 = vrot.lane.b32.xlu0 %v1342, 126
          %v1350 = vpop.permute.xlu0 %1349
          %1351 = vrot.lane.b32.xlu0 %v1343, 126
          %v1352 = vpop.permute.xlu0 %1351
          %v1356 = vadd.f32 %v1337, %v1348
          %v1357 = vadd.f32 %v1338, %v1350
          %v1358 = vadd.f32 %v1339, %v1352
          %v1359 = vstv %s279
          %v1360 = vmul.f32 %v1231, %v1359
          %v1361 = vmul.f32 %v1232, %v1359
          %v1362 = vmul.f32 %v1233, %v1359
          %1366 = vrot.lane.b32.xlu0 %v1360, 125
          %v1367 = vpop.permute.xlu0 %1366
          %1368 = vrot.lane.b32.xlu0 %v1361, 125
          %v1369 = vpop.permute.xlu0 %1368
          %1370 = vrot.lane.b32.xlu0 %v1362, 125
          %v1371 = vpop.permute.xlu0 %1370
          %v1375 = vadd.f32 %v1356, %v1367
          %v1376 = vadd.f32 %v1357, %v1369
          %v1377 = vadd.f32 %v1358, %v1371
          %v1378 = vstv %s280
          %v1379 = vmul.f32 %v1231, %v1378
          %v1380 = vmul.f32 %v1232, %v1378
          %v1381 = vmul.f32 %v1233, %v1378
          %1385 = vrot.lane.b32.xlu0 %v1379, 124
          %v1386 = vpop.permute.xlu0 %1385
          %1387 = vrot.lane.b32.xlu0 %v1380, 124
          %v1388 = vpop.permute.xlu0 %1387
          %1389 = vrot.lane.b32.xlu0 %v1381, 124
          %v1390 = vpop.permute.xlu0 %1389
          %v1394 = vadd.f32 %v1375, %v1386
          %v1395 = vadd.f32 %v1376, %v1388
          %v1396 = vadd.f32 %v1377, %v1390
          %v1397 = vstv %s281
          %v1398 = vmul.f32 %v1231, %v1397
          %v1399 = vmul.f32 %v1232, %v1397
          %v1400 = vmul.f32 %v1233, %v1397
          %1404 = vrot.lane.b32.xlu0 %v1398, 123
          %v1405 = vpop.permute.xlu0 %1404
          %1406 = vrot.lane.b32.xlu0 %v1399, 123
          %v1407 = vpop.permute.xlu0 %1406
          %1408 = vrot.lane.b32.xlu0 %v1400, 123
          %v1409 = vpop.permute.xlu0 %1408
          %v1413 = vadd.f32 %v1394, %v1405
          %v1414 = vadd.f32 %v1395, %v1407
          %v1415 = vadd.f32 %v1396, %v1409
          %v1416 = vstv %s282
          %v1417 = vmul.f32 %v1231, %v1416
          %v1418 = vmul.f32 %v1232, %v1416
          %v1419 = vmul.f32 %v1233, %v1416
          %1423 = vrot.lane.b32.xlu0 %v1417, 122
          %v1424 = vpop.permute.xlu0 %1423
          %1425 = vrot.lane.b32.xlu0 %v1418, 122
          %v1426 = vpop.permute.xlu0 %1425
          %1427 = vrot.lane.b32.xlu0 %v1419, 122
          %v1428 = vpop.permute.xlu0 %1427
          %v1432 = vadd.f32 %v1413, %v1424
          %v1433 = vadd.f32 %v1414, %v1426
          %v1434 = vadd.f32 %v1415, %v1428
          %v1438 = vrot.slane %v1432, 1
          %v1439 = vrot.slane %v1433, 1
          %v1440 = vsel %vm566, %v1438, %v1439
          %v1441 = vrot.slane %v1434, 1
          %v1442 = vsel %vm566, %v1439, %v1441
          %v1445 = vadd.f32 %v1315, %v1440
          %v1446 = vadd.f32 %v1316, %v1442
          %v1447 = vstv %s283
          %v1448 = vmul.f32 %v1231, %v1447
          %v1449 = vmul.f32 %v1232, %v1447
          %v1450 = vmul.f32 %v1233, %v1447
          %v1451 = vstv %s284
          %v1452 = vmul.f32 %v1231, %v1451
          %v1453 = vmul.f32 %v1232, %v1451
          %v1454 = vmul.f32 %v1233, %v1451
          %1458 = vrot.lane.b32.xlu0 %v1452, 127
          %v1459 = vpop.permute.xlu0 %1458
          %1460 = vrot.lane.b32.xlu0 %v1453, 127
          %v1461 = vpop.permute.xlu0 %1460
          %1462 = vrot.lane.b32.xlu0 %v1454, 127
          %v1463 = vpop.permute.xlu0 %1462
          %v1467 = vadd.f32 %v1448, %v1459
          %v1468 = vadd.f32 %v1449, %v1461
          %v1469 = vadd.f32 %v1450, %v1463
          %v1470 = vstv %s285
          %v1471 = vmul.f32 %v1231, %v1470
          %v1472 = vmul.f32 %v1232, %v1470
          %v1473 = vmul.f32 %v1233, %v1470
          %1477 = vrot.lane.b32.xlu0 %v1471, 126
          %v1478 = vpop.permute.xlu0 %1477
          %1479 = vrot.lane.b32.xlu0 %v1472, 126
          %v1480 = vpop.permute.xlu0 %1479
          %1481 = vrot.lane.b32.xlu0 %v1473, 126
          %v1482 = vpop.permute.xlu0 %1481
          %v1486 = vadd.f32 %v1467, %v1478
          %v1487 = vadd.f32 %v1468, %v1480
          %v1488 = vadd.f32 %v1469, %v1482
          %v1489 = vstv %s286
          %v1490 = vmul.f32 %v1231, %v1489
          %v1491 = vmul.f32 %v1232, %v1489
          %v1492 = vmul.f32 %v1233, %v1489
          %1496 = vrot.lane.b32.xlu0 %v1490, 125
          %v1497 = vpop.permute.xlu0 %1496
          %1498 = vrot.lane.b32.xlu0 %v1491, 125
          %v1499 = vpop.permute.xlu0 %1498
          %1500 = vrot.lane.b32.xlu0 %v1492, 125
          %v1501 = vpop.permute.xlu0 %1500
          %v1505 = vadd.f32 %v1486, %v1497
          %v1506 = vadd.f32 %v1487, %v1499
          %v1507 = vadd.f32 %v1488, %v1501
          %v1508 = vstv %s287
          %v1509 = vmul.f32 %v1231, %v1508
          %v1510 = vmul.f32 %v1232, %v1508
          %v1511 = vmul.f32 %v1233, %v1508
          %1515 = vrot.lane.b32.xlu0 %v1509, 124
          %v1516 = vpop.permute.xlu0 %1515
          %1517 = vrot.lane.b32.xlu0 %v1510, 124
          %v1518 = vpop.permute.xlu0 %1517
          %1519 = vrot.lane.b32.xlu0 %v1511, 124
          %v1520 = vpop.permute.xlu0 %1519
          %v1524 = vadd.f32 %v1505, %v1516
          %v1525 = vadd.f32 %v1506, %v1518
          %v1526 = vadd.f32 %v1507, %v1520
          %v1527 = vstv %s288
          %v1528 = vmul.f32 %v1231, %v1527
          %v1529 = vmul.f32 %v1232, %v1527
          %v1530 = vmul.f32 %v1233, %v1527
          %1534 = vrot.lane.b32.xlu0 %v1528, 123
          %v1535 = vpop.permute.xlu0 %1534
          %1536 = vrot.lane.b32.xlu0 %v1529, 123
          %v1537 = vpop.permute.xlu0 %1536
          %1538 = vrot.lane.b32.xlu0 %v1530, 123
          %v1539 = vpop.permute.xlu0 %1538
          %v1543 = vadd.f32 %v1524, %v1535
          %v1544 = vadd.f32 %v1525, %v1537
          %v1545 = vadd.f32 %v1526, %v1539
          %v1546 = vstv %s289
          %v1547 = vmul.f32 %v1231, %v1546
          %v1548 = vmul.f32 %v1232, %v1546
          %v1549 = vmul.f32 %v1233, %v1546
          %1553 = vrot.lane.b32.xlu0 %v1547, 122
          %v1554 = vpop.permute.xlu0 %1553
          %1555 = vrot.lane.b32.xlu0 %v1548, 122
          %v1556 = vpop.permute.xlu0 %1555
          %1557 = vrot.lane.b32.xlu0 %v1549, 122
          %v1558 = vpop.permute.xlu0 %1557
          %v1562 = vadd.f32 %v1543, %v1554
          %v1563 = vadd.f32 %v1544, %v1556
          %v1564 = vadd.f32 %v1545, %v1558
          %v1568 = vrot.slane %v1562, 2
          %v1569 = vrot.slane %v1563, 2
          %v1570 = vsel %vm697, %v1568, %v1569
          %v1571 = vrot.slane %v1564, 2
          %v1572 = vsel %vm697, %v1569, %v1571
          %v1575 = vadd.f32 %v1445, %v1570
          %v1576 = vadd.f32 %v1446, %v1572
          %v1577 = vstv %s290
          %v1578 = vmul.f32 %v1231, %v1577
          %v1579 = vmul.f32 %v1232, %v1577
          %v1580 = vmul.f32 %v1233, %v1577
          %v1581 = vstv %s291
          %v1582 = vmul.f32 %v1231, %v1581
          %v1583 = vmul.f32 %v1232, %v1581
          %v1584 = vmul.f32 %v1233, %v1581
          %1588 = vrot.lane.b32.xlu0 %v1582, 127
          %v1589 = vpop.permute.xlu0 %1588
          %1590 = vrot.lane.b32.xlu0 %v1583, 127
          %v1591 = vpop.permute.xlu0 %1590
          %1592 = vrot.lane.b32.xlu0 %v1584, 127
          %v1593 = vpop.permute.xlu0 %1592
          %v1597 = vadd.f32 %v1578, %v1589
          %v1598 = vadd.f32 %v1579, %v1591
          %v1599 = vadd.f32 %v1580, %v1593
          %v1600 = vstv %s292
          %v1601 = vmul.f32 %v1231, %v1600
          %v1602 = vmul.f32 %v1232, %v1600
          %v1603 = vmul.f32 %v1233, %v1600
          %1607 = vrot.lane.b32.xlu0 %v1601, 126
          %v1608 = vpop.permute.xlu0 %1607
          %1609 = vrot.lane.b32.xlu0 %v1602, 126
          %v1610 = vpop.permute.xlu0 %1609
          %1611 = vrot.lane.b32.xlu0 %v1603, 126
          %v1612 = vpop.permute.xlu0 %1611
          %v1616 = vadd.f32 %v1597, %v1608
          %v1617 = vadd.f32 %v1598, %v1610
          %v1618 = vadd.f32 %v1599, %v1612
          %v1619 = vstv %s293
          %v1620 = vmul.f32 %v1231, %v1619
          %v1621 = vmul.f32 %v1232, %v1619
          %v1622 = vmul.f32 %v1233, %v1619
          %1626 = vrot.lane.b32.xlu0 %v1620, 125
          %v1627 = vpop.permute.xlu0 %1626
          %1628 = vrot.lane.b32.xlu0 %v1621, 125
          %v1629 = vpop.permute.xlu0 %1628
          %1630 = vrot.lane.b32.xlu0 %v1622, 125
          %v1631 = vpop.permute.xlu0 %1630
          %v1635 = vadd.f32 %v1616, %v1627
          %v1636 = vadd.f32 %v1617, %v1629
          %v1637 = vadd.f32 %v1618, %v1631
          %v1638 = vstv %s294
          %v1639 = vmul.f32 %v1231, %v1638
          %v1640 = vmul.f32 %v1232, %v1638
          %v1641 = vmul.f32 %v1233, %v1638
          %1645 = vrot.lane.b32.xlu0 %v1639, 124
          %v1646 = vpop.permute.xlu0 %1645
          %1647 = vrot.lane.b32.xlu0 %v1640, 124
          %v1648 = vpop.permute.xlu0 %1647
          %1649 = vrot.lane.b32.xlu0 %v1641, 124
          %v1650 = vpop.permute.xlu0 %1649
          %v1654 = vadd.f32 %v1635, %v1646
          %v1655 = vadd.f32 %v1636, %v1648
          %v1656 = vadd.f32 %v1637, %v1650
          %v1657 = vstv %s295
          %v1658 = vmul.f32 %v1231, %v1657
          %v1659 = vmul.f32 %v1232, %v1657
          %v1660 = vmul.f32 %v1233, %v1657
          %1664 = vrot.lane.b32.xlu0 %v1658, 123
          %v1665 = vpop.permute.xlu0 %1664
          %1666 = vrot.lane.b32.xlu0 %v1659, 123
          %v1667 = vpop.permute.xlu0 %1666
          %1668 = vrot.lane.b32.xlu0 %v1660, 123
          %v1669 = vpop.permute.xlu0 %1668
          %v1673 = vadd.f32 %v1654, %v1665
          %v1674 = vadd.f32 %v1655, %v1667
          %v1675 = vadd.f32 %v1656, %v1669
          %v1676 = vstv %s296
          %v1677 = vmul.f32 %v1231, %v1676
          %v1678 = vmul.f32 %v1232, %v1676
          %v1679 = vmul.f32 %v1233, %v1676
          %1683 = vrot.lane.b32.xlu0 %v1677, 122
          %v1684 = vpop.permute.xlu0 %1683
          %1685 = vrot.lane.b32.xlu0 %v1678, 122
          %v1686 = vpop.permute.xlu0 %1685
          %1687 = vrot.lane.b32.xlu0 %v1679, 122
          %v1688 = vpop.permute.xlu0 %1687
          %v1692 = vadd.f32 %v1673, %v1684
          %v1693 = vadd.f32 %v1674, %v1686
          %v1694 = vadd.f32 %v1675, %v1688
          %v1698 = vrot.slane %v1692, 3
          %v1699 = vrot.slane %v1693, 3
          %v1700 = vsel %vm828, %v1698, %v1699
          %v1701 = vrot.slane %v1694, 3
          %v1702 = vsel %vm828, %v1699, %v1701
          %v1705 = vadd.f32 %v1575, %v1700
          %v1706 = vadd.f32 %v1576, %v1702
          %v1707 = vstv %s297
          %v1708 = vmul.f32 %v1231, %v1707
          %v1709 = vmul.f32 %v1232, %v1707
          %v1710 = vmul.f32 %v1233, %v1707
          %v1711 = vstv %s298
          %v1712 = vmul.f32 %v1231, %v1711
          %v1713 = vmul.f32 %v1232, %v1711
          %v1714 = vmul.f32 %v1233, %v1711
          %1718 = vrot.lane.b32.xlu0 %v1712, 127
          %v1719 = vpop.permute.xlu0 %1718
          %1720 = vrot.lane.b32.xlu0 %v1713, 127
          %v1721 = vpop.permute.xlu0 %1720
          %1722 = vrot.lane.b32.xlu0 %v1714, 127
          %v1723 = vpop.permute.xlu0 %1722
          %v1727 = vadd.f32 %v1708, %v1719
          %v1728 = vadd.f32 %v1709, %v1721
          %v1729 = vadd.f32 %v1710, %v1723
          %v1730 = vstv %s299
          %v1731 = vmul.f32 %v1231, %v1730
          %v1732 = vmul.f32 %v1232, %v1730
          %v1733 = vmul.f32 %v1233, %v1730
          %1737 = vrot.lane.b32.xlu0 %v1731, 126
          %v1738 = vpop.permute.xlu0 %1737
          %1739 = vrot.lane.b32.xlu0 %v1732, 126
          %v1740 = vpop.permute.xlu0 %1739
          %1741 = vrot.lane.b32.xlu0 %v1733, 126
          %v1742 = vpop.permute.xlu0 %1741
          %v1746 = vadd.f32 %v1727, %v1738
          %v1747 = vadd.f32 %v1728, %v1740
          %v1748 = vadd.f32 %v1729, %v1742
          %v1749 = vstv %s300
          %v1750 = vmul.f32 %v1231, %v1749
          %v1751 = vmul.f32 %v1232, %v1749
          %v1752 = vmul.f32 %v1233, %v1749
          %1756 = vrot.lane.b32.xlu0 %v1750, 125
          %v1757 = vpop.permute.xlu0 %1756
          %1758 = vrot.lane.b32.xlu0 %v1751, 125
          %v1759 = vpop.permute.xlu0 %1758
          %1760 = vrot.lane.b32.xlu0 %v1752, 125
          %v1761 = vpop.permute.xlu0 %1760
          %v1765 = vadd.f32 %v1746, %v1757
          %v1766 = vadd.f32 %v1747, %v1759
          %v1767 = vadd.f32 %v1748, %v1761
          %v1768 = vstv %s301
          %v1769 = vmul.f32 %v1231, %v1768
          %v1770 = vmul.f32 %v1232, %v1768
          %v1771 = vmul.f32 %v1233, %v1768
          %1775 = vrot.lane.b32.xlu0 %v1769, 124
          %v1776 = vpop.permute.xlu0 %1775
          %1777 = vrot.lane.b32.xlu0 %v1770, 124
          %v1778 = vpop.permute.xlu0 %1777
          %1779 = vrot.lane.b32.xlu0 %v1771, 124
          %v1780 = vpop.permute.xlu0 %1779
          %v1784 = vadd.f32 %v1765, %v1776
          %v1785 = vadd.f32 %v1766, %v1778
          %v1786 = vadd.f32 %v1767, %v1780
          %v1787 = vstv %s302
          %v1788 = vmul.f32 %v1231, %v1787
          %v1789 = vmul.f32 %v1232, %v1787
          %v1790 = vmul.f32 %v1233, %v1787
          %1794 = vrot.lane.b32.xlu0 %v1788, 123
          %v1795 = vpop.permute.xlu0 %1794
          %1796 = vrot.lane.b32.xlu0 %v1789, 123
          %v1797 = vpop.permute.xlu0 %1796
          %1798 = vrot.lane.b32.xlu0 %v1790, 123
          %v1799 = vpop.permute.xlu0 %1798
          %v1803 = vadd.f32 %v1784, %v1795
          %v1804 = vadd.f32 %v1785, %v1797
          %v1805 = vadd.f32 %v1786, %v1799
          %v1806 = vstv %s303
          %v1807 = vmul.f32 %v1231, %v1806
          %v1808 = vmul.f32 %v1232, %v1806
          %v1809 = vmul.f32 %v1233, %v1806
          %1813 = vrot.lane.b32.xlu0 %v1807, 122
          %v1814 = vpop.permute.xlu0 %1813
          %1815 = vrot.lane.b32.xlu0 %v1808, 122
          %v1816 = vpop.permute.xlu0 %1815
          %1817 = vrot.lane.b32.xlu0 %v1809, 122
          %v1818 = vpop.permute.xlu0 %1817
          %v1822 = vadd.f32 %v1803, %v1814
          %v1823 = vadd.f32 %v1804, %v1816
          %v1824 = vadd.f32 %v1805, %v1818
          %v1828 = vrot.slane %v1822, 4
          %v1829 = vrot.slane %v1823, 4
          %v1830 = vsel %vm959, %v1828, %v1829
          %v1831 = vrot.slane %v1824, 4
          %v1832 = vsel %vm959, %v1829, %v1831
          %v1835 = vadd.f32 %v1705, %v1830
          %v1836 = vadd.f32 %v1706, %v1832
          %v1837 = vstv %s304
          %v1838 = vmul.f32 %v1231, %v1837
          %v1839 = vmul.f32 %v1232, %v1837
          %v1840 = vmul.f32 %v1233, %v1837
          %v1841 = vstv %s305
          %v1842 = vmul.f32 %v1231, %v1841
          %v1843 = vmul.f32 %v1232, %v1841
          %v1844 = vmul.f32 %v1233, %v1841
          %1848 = vrot.lane.b32.xlu0 %v1842, 127
          %v1849 = vpop.permute.xlu0 %1848
          %1850 = vrot.lane.b32.xlu0 %v1843, 127
          %v1851 = vpop.permute.xlu0 %1850
          %1852 = vrot.lane.b32.xlu0 %v1844, 127
          %v1853 = vpop.permute.xlu0 %1852
          %v1857 = vadd.f32 %v1838, %v1849
          %v1858 = vadd.f32 %v1839, %v1851
          %v1859 = vadd.f32 %v1840, %v1853
          %v1860 = vstv %s306
          %v1861 = vmul.f32 %v1231, %v1860
          %v1862 = vmul.f32 %v1232, %v1860
          %v1863 = vmul.f32 %v1233, %v1860
          %1867 = vrot.lane.b32.xlu0 %v1861, 126
          %v1868 = vpop.permute.xlu0 %1867
          %1869 = vrot.lane.b32.xlu0 %v1862, 126
          %v1870 = vpop.permute.xlu0 %1869
          %1871 = vrot.lane.b32.xlu0 %v1863, 126
          %v1872 = vpop.permute.xlu0 %1871
          %v1876 = vadd.f32 %v1857, %v1868
          %v1877 = vadd.f32 %v1858, %v1870
          %v1878 = vadd.f32 %v1859, %v1872
          %v1879 = vstv %s307
          %v1880 = vmul.f32 %v1231, %v1879
          %v1881 = vmul.f32 %v1232, %v1879
          %v1882 = vmul.f32 %v1233, %v1879
          %1886 = vrot.lane.b32.xlu0 %v1880, 125
          %v1887 = vpop.permute.xlu0 %1886
          %1888 = vrot.lane.b32.xlu0 %v1881, 125
          %v1889 = vpop.permute.xlu0 %1888
          %1890 = vrot.lane.b32.xlu0 %v1882, 125
          %v1891 = vpop.permute.xlu0 %1890
          %v1895 = vadd.f32 %v1876, %v1887
          %v1896 = vadd.f32 %v1877, %v1889
          %v1897 = vadd.f32 %v1878, %v1891
          %v1898 = vstv %s308
          %v1899 = vmul.f32 %v1231, %v1898
          %v1900 = vmul.f32 %v1232, %v1898
          %v1901 = vmul.f32 %v1233, %v1898
          %1905 = vrot.lane.b32.xlu0 %v1899, 124
          %v1906 = vpop.permute.xlu0 %1905
          %1907 = vrot.lane.b32.xlu0 %v1900, 124
          %v1908 = vpop.permute.xlu0 %1907
          %1909 = vrot.lane.b32.xlu0 %v1901, 124
          %v1910 = vpop.permute.xlu0 %1909
          %v1914 = vadd.f32 %v1895, %v1906
          %v1915 = vadd.f32 %v1896, %v1908
          %v1916 = vadd.f32 %v1897, %v1910
          %v1917 = vstv %s309
          %v1918 = vmul.f32 %v1231, %v1917
          %v1919 = vmul.f32 %v1232, %v1917
          %v1920 = vmul.f32 %v1233, %v1917
          %1924 = vrot.lane.b32.xlu0 %v1918, 123
          %v1925 = vpop.permute.xlu0 %1924
          %1926 = vrot.lane.b32.xlu0 %v1919, 123
          %v1927 = vpop.permute.xlu0 %1926
          %1928 = vrot.lane.b32.xlu0 %v1920, 123
          %v1929 = vpop.permute.xlu0 %1928
          %v1933 = vadd.f32 %v1914, %v1925
          %v1934 = vadd.f32 %v1915, %v1927
          %v1935 = vadd.f32 %v1916, %v1929
          %v1936 = vstv %s310
          %v1937 = vmul.f32 %v1231, %v1936
          %v1938 = vmul.f32 %v1232, %v1936
          %v1939 = vmul.f32 %v1233, %v1936
          %1943 = vrot.lane.b32.xlu0 %v1937, 122
          %v1944 = vpop.permute.xlu0 %1943
          %1945 = vrot.lane.b32.xlu0 %v1938, 122
          %v1946 = vpop.permute.xlu0 %1945
          %1947 = vrot.lane.b32.xlu0 %v1939, 122
          %v1948 = vpop.permute.xlu0 %1947
          %v1952 = vadd.f32 %v1933, %v1944
          %v1953 = vadd.f32 %v1934, %v1946
          %v1954 = vadd.f32 %v1935, %v1948
          %v1958 = vrot.slane %v1952, 5
          %v1959 = vrot.slane %v1953, 5
          %v1960 = vsel %vm1090, %v1958, %v1959
          %v1961 = vrot.slane %v1954, 5
          %v1962 = vsel %vm1090, %v1959, %v1961
          %v1965 = vadd.f32 %v1835, %v1960
          %v1966 = vadd.f32 %v1836, %v1962
          %v1967 = vstv %s311
          %v1968 = vmul.f32 %v1231, %v1967
          %v1969 = vmul.f32 %v1232, %v1967
          %v1970 = vmul.f32 %v1233, %v1967
          %v1971 = vstv %s312
          %v1972 = vmul.f32 %v1231, %v1971
          %v1973 = vmul.f32 %v1232, %v1971
          %v1974 = vmul.f32 %v1233, %v1971
          %1978 = vrot.lane.b32.xlu0 %v1972, 127
          %v1979 = vpop.permute.xlu0 %1978
          %1980 = vrot.lane.b32.xlu0 %v1973, 127
          %v1981 = vpop.permute.xlu0 %1980
          %1982 = vrot.lane.b32.xlu0 %v1974, 127
          %v1983 = vpop.permute.xlu0 %1982
          %v1987 = vadd.f32 %v1968, %v1979
          %v1988 = vadd.f32 %v1969, %v1981
          %v1989 = vadd.f32 %v1970, %v1983
          %v1990 = vstv %s313
          %v1991 = vmul.f32 %v1231, %v1990
          %v1992 = vmul.f32 %v1232, %v1990
          %v1993 = vmul.f32 %v1233, %v1990
          %1997 = vrot.lane.b32.xlu0 %v1991, 126
          %v1998 = vpop.permute.xlu0 %1997
          %1999 = vrot.lane.b32.xlu0 %v1992, 126
          %v2000 = vpop.permute.xlu0 %1999
          %2001 = vrot.lane.b32.xlu0 %v1993, 126
          %v2002 = vpop.permute.xlu0 %2001
          %v2006 = vadd.f32 %v1987, %v1998
          %v2007 = vadd.f32 %v1988, %v2000
          %v2008 = vadd.f32 %v1989, %v2002
          %v2009 = vstv %s314
          %v2010 = vmul.f32 %v1231, %v2009
          %v2011 = vmul.f32 %v1232, %v2009
          %v2012 = vmul.f32 %v1233, %v2009
          %2016 = vrot.lane.b32.xlu0 %v2010, 125
          %v2017 = vpop.permute.xlu0 %2016
          %2018 = vrot.lane.b32.xlu0 %v2011, 125
          %v2019 = vpop.permute.xlu0 %2018
          %2020 = vrot.lane.b32.xlu0 %v2012, 125
          %v2021 = vpop.permute.xlu0 %2020
          %v2025 = vadd.f32 %v2006, %v2017
          %v2026 = vadd.f32 %v2007, %v2019
          %v2027 = vadd.f32 %v2008, %v2021
          %v2028 = vstv %s315
          %v2029 = vmul.f32 %v1231, %v2028
          %v2030 = vmul.f32 %v1232, %v2028
          %v2031 = vmul.f32 %v1233, %v2028
          %2035 = vrot.lane.b32.xlu0 %v2029, 124
          %v2036 = vpop.permute.xlu0 %2035
          %2037 = vrot.lane.b32.xlu0 %v2030, 124
          %v2038 = vpop.permute.xlu0 %2037
          %2039 = vrot.lane.b32.xlu0 %v2031, 124
          %v2040 = vpop.permute.xlu0 %2039
          %v2044 = vadd.f32 %v2025, %v2036
          %v2045 = vadd.f32 %v2026, %v2038
          %v2046 = vadd.f32 %v2027, %v2040
          %v2047 = vstv %s316
          %v2048 = vmul.f32 %v1231, %v2047
          %v2049 = vmul.f32 %v1232, %v2047
          %v2050 = vmul.f32 %v1233, %v2047
          %2054 = vrot.lane.b32.xlu0 %v2048, 123
          %v2055 = vpop.permute.xlu0 %2054
          %2056 = vrot.lane.b32.xlu0 %v2049, 123
          %v2057 = vpop.permute.xlu0 %2056
          %2058 = vrot.lane.b32.xlu0 %v2050, 123
          %v2059 = vpop.permute.xlu0 %2058
          %v2063 = vadd.f32 %v2044, %v2055
          %v2064 = vadd.f32 %v2045, %v2057
          %v2065 = vadd.f32 %v2046, %v2059
          %v2066 = vstv %s317
          %v2067 = vmul.f32 %v1231, %v2066
          %v2068 = vmul.f32 %v1232, %v2066
          %v2069 = vmul.f32 %v1233, %v2066
          %2073 = vrot.lane.b32.xlu0 %v2067, 122
          %v2074 = vpop.permute.xlu0 %2073
          %2075 = vrot.lane.b32.xlu0 %v2068, 122
          %v2076 = vpop.permute.xlu0 %2075
          %2077 = vrot.lane.b32.xlu0 %v2069, 122
          %v2078 = vpop.permute.xlu0 %2077
          %v2082 = vadd.f32 %v2063, %v2074
          %v2083 = vadd.f32 %v2064, %v2076
          %v2084 = vadd.f32 %v2065, %v2078
          %v2088 = vrot.slane %v2082, 6
          %v2089 = vrot.slane %v2083, 6
          %v2090 = vsel %vm1221, %v2088, %v2089
          %v2091 = vrot.slane %v2084, 6
          %v2092 = vsel %vm1221, %v2089, %v2091
          %v2095 = vadd.f32 %v1965, %v2090
          %v2096 = vadd.f32 %v1966, %v2092
          %v2097 = vxor.u32 %v2095, 2147483648
          %v2098 = vxor.u32 %v2096, 2147483648
          %v2099 = vmul.f32 %v2097, 1.442695
          %v2100 = vpow.pop %v2099
          %v2101 = vmul.f32 %v2098, 1.442695
          %v2102 = vpow.pop %v2101
          %v2103 = vadd.f32 %v2100, 1.0
          %v2104 = vadd.f32 %v2102, 1.0
          %v2105 = vrcp.pop %v2103
          %v2106 = vmul.f32 1.0, %v2105
          %v2107 = vrcp.pop %v2104
          %v2108 = vmul.f32 1.0, %v2107
          %2109 = vst.msk [vmem:[%s189] sm:$0xff] %vm207, %v2106
          %2110 = vst.msk [vmem:[%s189 + $0x8] sm:$0xff] %vm207, %v2108
        $region44: #{tpu_custom_call.1} parent=27 // pred_fallthru
          _
        %s2111 = sand.u32 %s89, 1
        %s2112 = scalar_lea.sflag [#allocation7], %s2111
        %s2113 = sand.u32 %s89, 1
        %s2114 = smul.addr %s2113, 16
        %s2115 = scalar_lea.vmem [#allocation10], %s2114
        // Predicated region
        $region45: #{tpu_custom_call.1} parent=27 // pred_check
          %p2116 = pneg %p99
        $region46: #{tpu_custom_call.1} parent=27 // pred_check_branch
          %2118 = sbr.rel (%p2116) target = $region48
        $region47: #{tpu_custom_call.1} parent=27 // pred_region
          %s2120 = ssub.s32 256, 256
          %2121 = vsyncadd %s2112, %s2120
          %s2122 = smul.addr %s24, 2
          %s2123 = smul.addr %s2122, 128
          %s2124 = scalar_lea.hbm %s2, %s2123
          %s2125 = sshll.u32 %s2115, 4
          %s2126 = int_to_ptr.vmem [resolvable:$true] %s2125
          %2131 = dma.vmem_to_hbm [thread:$0]  %s2126, 256, %s2124, %s2112, 128, 128, 8
        $region48: #{tpu_custom_call.1} parent=27 // pred_fallthru
          _
      $region28: #{tpu_custom_call.1} parent=5 // pred_fallthru
        _
      %p2132 = scmp.le.s32.totalorder 2, %s15
      // Predicated region
      $region49: #{tpu_custom_call.1} parent=5 // pred_check
        %p2133 = pneg %p2132
      $region50: #{tpu_custom_call.1} parent=5 // pred_check_branch
        %2135 = sbr.rel (%p2133) target = $region52
      $region51: #{tpu_custom_call.1} parent=5 // pred_region
        %s2136 = ssub.s32 %s15, 2
        // Predicated region
        $region53: #{tpu_custom_call.1} parent=51 // pred_check
          %p2137 = pneg %p105
        $region54: #{tpu_custom_call.1} parent=51 // pred_check_branch
          %2139 = sbr.rel (%p2137) target = $region56
        $region55: #{tpu_custom_call.1} parent=51 // pred_region
          %s2140 = sand.u32 %s90, 1
          %s2141 = scalar_lea.sflag [#allocation7], %s2140
          %s2142 = sand.u32 %s90, 1
          %s2143 = smul.addr %s2142, 16
          %s2144 = scalar_lea.vmem [#allocation10], %s2143
          %2145 = dma.done %s2141, 256
        $region56: #{tpu_custom_call.1} parent=51 // pred_fallthru
          _
      $region52: #{tpu_custom_call.1} parent=5 // pred_fallthru
        _
    $region6: #{tpu_custom_call.1} parent=1 // loop_footer
      %s19 = sadd.s32 1, %s15
    $region7: #{tpu_custom_call.1} parent=1 // loop_footer_branch
      %14 = sbr.rel target = $region3
    $region8: #{tpu_custom_call.1} parent=1 // loop_exit
      _
    %2146 = vsyncpa [#allocation6], 1
    %s2147 = scalar_lea.sflag [#allocation6], 1
    %2148 = vsyncpa %s2147, 1
    %2149 = vsyncpa [#allocation7], 1
    %s2150 = scalar_lea.sflag [#allocation7], 1
    %2151 = vsyncpa %s2150, 1
    %2152 = vsyncpa [#allocation8], 1
    %s2153 = scalar_lea.sflag [#allocation8], 1
    %2154 = vsyncpa %s2153, 1

</llo_original>
